<compile_context>
chip_gen: v6e
topology: v6e:2x2x1
jax: 0.10.0
libtpu: 0.0.40
codegen_flags: <defaults>
</compile_context>

<pallas_src>
import jax
import jax.numpy as jnp
from jax.experimental import pallas as pl
from jax.experimental.pallas import tpu as pltpu


def _round_up(v, m):
    return ((v + m - 1) // m) * m


def _cdiv(a, b):
    return (a + b - 1) // b


def s_from_eta_kernel(x_ref, t_ref, w1_ref, wt_ref, b1_ref, w2_ref, b2_ref, o_ref):
    """One batch tile:  o = eta(x, t) / gamma(t).

    x_ref : (TB, D)  f32 (streamed; cast to MXU dtype in-kernel)
    t_ref : (TB, 1)  f32 (streamed)
    w1_ref: (D, H)   MXU dtype (VMEM-resident)
    wt_ref: (1, H)   f32       (VMEM-resident)
    b1_ref: (1, H)   f32       (VMEM-resident)
    w2_ref: (H, D)   MXU dtype (VMEM-resident)
    b2_ref: (1, D)   f32       (VMEM-resident)
    o_ref : (TB, D)  f32
    """
    x = x_ref[...]
    t = t_ref[...]

    # eta(x, t): cast to the MXU operand dtype in-kernel (VPU has slack); the
    # time conditioning + bias stay in f32 on the VPU.
    h = jnp.dot(x.astype(w1_ref.dtype), w1_ref[...],
                preferred_element_type=jnp.float32)
    h = h + t * wt_ref[...] + b1_ref[...]
    h = jnp.maximum(h, 0.0)
    eta = jnp.dot(h.astype(w2_ref.dtype), w2_ref[...],
                  preferred_element_type=jnp.float32)
    eta = eta + b2_ref[...]

    # gamma(t) = sqrt(t(1-t)) + eps on the narrow (TB, 1) column.
    # NaN-safe clamp: the ragged last tile may read garbage t in out-of-bounds
    # rows (their writes are dropped, but keep the compute NaN-free).
    eps = 1e-6
    tc = jnp.where(t > eps, t, eps)
    tc = jnp.where(tc < 1.0 - eps, tc, 1.0 - eps)
    g = jnp.sqrt(tc * (1.0 - tc)) + 1e-4

    # EUP approximate reciprocal + one Newton step (~f32 accuracy); the wide
    # (TB, D) op is then a multiply instead of a divide.
    inv_g = pl.reciprocal(g, approx=True)
    inv_g = inv_g * (2.0 - g * inv_g)

    o_ref[...] = eta * inv_g


def s_from_eta(x, t, w1, b1, wt, w2, b2, *, block_b=4096,
               matmul_dtype=jnp.bfloat16):
    """s(x, t) = eta(x, t) / gamma(t) with the synthetic eta/gamma above.

    block_b: requested batch rows per grid step.  Lane-padded, double-buffered
    streaming cost is ~2 * TB * 4 * (pad128(D) + 128 + pad128(D)) bytes
    (~3 KB/row at D=32); the tile is clamped so this stays under ~24 MiB,
    safely inside the 32 MiB scoped VMEM default on every chip (incl. v7x).
    """
    B, D = x.shape
    H = w1.shape[1]

    xf = x.astype(jnp.float32)                 # no-op if already f32; no bf16 pre-cast
    tf = t.reshape(B, 1).astype(jnp.float32)   # t in (0, 1)

    # Small resident parameters; only the matmul operands take the MXU dtype.
    w1_m = w1.astype(matmul_dtype)
    w2_m = w2.astype(matmul_dtype)
    wt_f = wt.reshape(1, H).astype(jnp.float32)
    b1_f = b1.reshape(1, H).astype(jnp.float32)
    b2_f = b2.reshape(1, D).astype(jnp.float32)

    # ---- batch tile sizing (lane-padding aware) ----
    lane = 128
    bytes_per_row = 4 * (_round_up(D, lane) + lane + _round_up(D, lane))  # x + t + out
    vmem_budget = 24 << 20                       # headroom under 32 MiB scoped default
    max_tb = max(16, (vmem_budget // (2 * bytes_per_row)) // 16 * 16)

    tb = min(block_b, _round_up(B, 16), max_tb)
    if B > 16:
        # Keep >= 2 grid steps so the "parallel" axis can occupy both v7x TCs.
        tb = min(tb, _round_up(_cdiv(B, 2), 16))
    tb = max(16, _round_up(tb, 16))              # bf16-safe row multiple

    grid = (_cdiv(B, tb),)                       # ragged last tile; no jnp.pad

    out = pl.pallas_call(
        s_from_eta_kernel,
        out_shape=jax.ShapeDtypeStruct((B, D), jnp.float32),
        grid=grid,
        in_specs=[
            pl.BlockSpec((tb, D), lambda i: (i, 0)),   # x tile: streamed
            pl.BlockSpec((tb, 1), lambda i: (i, 0)),   # t tile: streamed
            pl.BlockSpec((D, H), lambda i: (0, 0)),    # weights: VMEM-resident
            pl.BlockSpec((1, H), lambda i: (0, 0)),
            pl.BlockSpec((1, H), lambda i: (0, 0)),
            pl.BlockSpec((H, D), lambda i: (0, 0)),
            pl.BlockSpec((1, D), lambda i: (0, 0)),
        ],
        out_specs=pl.BlockSpec((tb, D), lambda i: (i, 0)),
        compiler_params=pltpu.CompilerParams(
            dimension_semantics=("parallel",)),
    )(xf, tf, w1_m, wt_f, b1_f, w2_m, b2_f)
    return out


def s_from_eta_ref(x, t, w1, b1, wt, w2, b2):
    t2 = t.reshape(-1, 1).astype(jnp.float32)
    h = jnp.maximum(x.astype(jnp.float32) @ w1 + b1 + t2 * wt, 0.0)
    eta = h @ w2 + b2
    gamma = jnp.sqrt(t2 * (1.0 - t2)) + 1e-4
    return eta / gamma


if __name__ == "__main__":
    # Non-multiple batch exercises the ragged last tile; block_b=128 gives a
    # 3-step grid (2 full tiles + 1 ragged tile of 44 rows).
    B, D, H = 300, 32, 64

    key = jax.random.PRNGKey(0)
    kx, kt, k1, kb1, kwt, k2, kb2 = jax.random.split(key, 7)

    x = jax.random.normal(kx, (B, D), dtype=jnp.float32)
    # t in (0, 1) so gamma(t) is well defined.
    t = jax.random.uniform(kt, (B,), minval=0.05, maxval=0.95, dtype=jnp.float32)

    # deterministic synthetic parameters for eta
    w1 = jax.random.normal(k1, (D, H), dtype=jnp.float32) * (1.0 / jnp.sqrt(D))
    b1 = jax.random.normal(kb1, (1, H), dtype=jnp.float32) * 0.01
    wt = jax.random.normal(kwt, (1, H), dtype=jnp.float32) * 0.1
    w2 = jax.random.normal(k2, (H, D), dtype=jnp.float32) * (1.0 / jnp.sqrt(H))
    b2 = jax.random.normal(kb2, (1, D), dtype=jnp.float32) * 0.01

    ref = s_from_eta_ref(x, t, w1, b1, wt, w2, b2)

    # f32 MXU operands.
    out_f32 = s_from_eta(x, t, w1, b1, wt, w2, b2, block_b=128,
                         matmul_dtype=jnp.float32)
    jax.block_until_ready(out_f32)
    assert out_f32.shape == (B, D)
    assert jnp.allclose(out_f32, ref, atol=1e-4, rtol=1e-4), "f32 mismatch vs. reference"

    # Default path: bf16 MXU operands (bf16-native MXU on v5e/v6e/v7x), f32 accumulate.
    out_bf16 = s_from_eta(x, t, w1, b1, wt, w2, b2, block_b=128)
    jax.block_until_ready(out_bf16)
    assert jnp.allclose(out_bf16, ref, atol=5e-2, rtol=5e-2), "bf16 mismatch vs. reference"

    print("KERNEL_OK")
</pallas_src>

<mosaic_0001>
module attributes {stable_mosaic.version = 11 : i64} {
  func.func @s_from_eta_kernel(%arg0: i32, %arg1: memref<128x32xf32, #tpu.memory_space<vmem>>, %arg2: memref<128x1xf32, #tpu.memory_space<vmem>>, %arg3: memref<32x64xf32, #tpu.memory_space<vmem>>, %arg4: memref<1x64xf32, #tpu.memory_space<vmem>>, %arg5: memref<1x64xf32, #tpu.memory_space<vmem>>, %arg6: memref<64x32xf32, #tpu.memory_space<vmem>>, %arg7: memref<1x32xf32, #tpu.memory_space<vmem>>, %arg8: memref<128x32xf32, #tpu.memory_space<vmem>>) attributes {dimension_semantics = [#tpu.dimension_semantics<parallel>], iteration_bounds = array<i64: 3>, scalar_prefetch = 0 : i64, scratch_operands = 0 : i64, tpu.core_type = #tpu.core_type<tc>, window_params = [{transform_indices = @transform_0, window_bounds = array<i64: 128, 32>}, {transform_indices = @transform_1, window_bounds = array<i64: 128, 1>}, {pipeline_mode = #tpu.pipeline_mode<synchronous>, transform_indices = @transform_2, window_bounds = array<i64: 32, 64>}, {pipeline_mode = #tpu.pipeline_mode<synchronous>, transform_indices = @transform_3, window_bounds = array<i64: 1, 64>}, {pipeline_mode = #tpu.pipeline_mode<synchronous>, transform_indices = @transform_4, window_bounds = array<i64: 1, 64>}, {pipeline_mode = #tpu.pipeline_mode<synchronous>, transform_indices = @transform_5, window_bounds = array<i64: 64, 32>}, {pipeline_mode = #tpu.pipeline_mode<synchronous>, transform_indices = @transform_6, window_bounds = array<i64: 1, 32>}, {transform_indices = @transform_7, window_bounds = array<i64: 128, 32>}]} {
    %c0 = arith.constant 0 : index
    %c0_0 = arith.constant 0 : index
    %0 = vector.load %arg1[%c0, %c0_0] : memref<128x32xf32, #tpu.memory_space<vmem>>, vector<128x32xf32>
    %c0_1 = arith.constant 0 : index
    %c0_2 = arith.constant 0 : index
    %1 = vector.load %arg2[%c0_1, %c0_2] : memref<128x1xf32, #tpu.memory_space<vmem>>, vector<128x1xf32>
    %c0_3 = arith.constant 0 : index
    %c0_4 = arith.constant 0 : index
    %2 = vector.load %arg3[%c0_3, %c0_4] : memref<32x64xf32, #tpu.memory_space<vmem>>, vector<32x64xf32>
    %cst = arith.constant dense<0.000000e+00> : vector<128x64xf32>
    %3 = tpu.matmul %0, %2, %cst {dimension_numbers = #tpu.dot_dimension_numbers<[1], [0], [0], [1], [0, 0, 1, 1], [], []>} : vector<128x32xf32>, vector<32x64xf32>, vector<128x64xf32> -> vector<128x64xf32>
    %c0_5 = arith.constant 0 : index
    %c0_6 = arith.constant 0 : index
    %4 = vector.load %arg4[%c0_5, %c0_6] : memref<1x64xf32, #tpu.memory_space<vmem>>, vector<1x64xf32>
    %5 = vector.broadcast %1 : vector<128x1xf32> to vector<128x64xf32>
    %6 = vector.broadcast %4 : vector<1x64xf32> to vector<128x64xf32>
    %7 = arith.mulf %5, %6 : vector<128x64xf32>
    %8 = arith.addf %3, %7 : vector<128x64xf32>
    %c0_7 = arith.constant 0 : index
    %c0_8 = arith.constant 0 : index
    %9 = vector.load %arg5[%c0_7, %c0_8] : memref<1x64xf32, #tpu.memory_space<vmem>>, vector<1x64xf32>
    %10 = vector.broadcast %9 : vector<1x64xf32> to vector<128x64xf32>
    %11 = arith.addf %8, %10 : vector<128x64xf32>
    %cst_9 = arith.constant 0.000000e+00 : f32
    %12 = vector.broadcast %cst_9 : f32 to vector<128x64xf32>
    %13 = arith.maximumf %11, %12 : vector<128x64xf32>
    %c0_10 = arith.constant 0 : index
    %c0_11 = arith.constant 0 : index
    %14 = vector.load %arg6[%c0_10, %c0_11] : memref<64x32xf32, #tpu.memory_space<vmem>>, vector<64x32xf32>
    %cst_12 = arith.constant dense<0.000000e+00> : vector<128x32xf32>
    %15 = tpu.matmul %13, %14, %cst_12 {dimension_numbers = #tpu.dot_dimension_numbers<[1], [0], [0], [1], [0, 0, 1, 1], [], []>} : vector<128x64xf32>, vector<64x32xf32>, vector<128x32xf32> -> vector<128x32xf32>
    %c0_13 = arith.constant 0 : index
    %c0_14 = arith.constant 0 : index
    %16 = vector.load %arg7[%c0_13, %c0_14] : memref<1x32xf32, #tpu.memory_space<vmem>>, vector<1x32xf32>
    %17 = vector.broadcast %16 : vector<1x32xf32> to vector<128x32xf32>
    %18 = arith.addf %15, %17 : vector<128x32xf32>
    %cst_15 = arith.constant 9.99999997E-7 : f32
    %19 = vector.broadcast %cst_15 : f32 to vector<128x1xf32>
    %20 = arith.cmpf ogt, %1, %19 : vector<128x1xf32>
    %cst_16 = arith.constant 9.99999997E-7 : f32
    %21 = vector.broadcast %cst_16 : f32 to vector<128x1xf32>
    %22 = arith.select %20, %1, %21 : vector<128x1xi1>, vector<128x1xf32>
    %cst_17 = arith.constant 0.999998986 : f32
    %23 = vector.broadcast %cst_17 : f32 to vector<128x1xf32>
    %24 = arith.cmpf olt, %22, %23 : vector<128x1xf32>
    %cst_18 = arith.constant 0.999998986 : f32
    %25 = vector.broadcast %cst_18 : f32 to vector<128x1xf32>
    %26 = arith.select %24, %22, %25 : vector<128x1xi1>, vector<128x1xf32>
    %cst_19 = arith.constant 1.000000e+00 : f32
    %27 = vector.broadcast %cst_19 : f32 to vector<128x1xf32>
    %28 = arith.subf %27, %26 : vector<128x1xf32>
    %29 = arith.mulf %26, %28 : vector<128x1xf32>
    %30 = math.sqrt %29 : vector<128x1xf32>
    %cst_20 = arith.constant 9.99999974E-5 : f32
    %31 = vector.broadcast %cst_20 : f32 to vector<128x1xf32>
    %32 = arith.addf %30, %31 : vector<128x1xf32>
    %33 = tpu.reciprocal %32 {approx = true} : vector<128x1xf32> -> vector<128x1xf32>
    %34 = arith.mulf %32, %33 : vector<128x1xf32>
    %cst_21 = arith.constant 2.000000e+00 : f32
    %35 = vector.broadcast %cst_21 : f32 to vector<128x1xf32>
    %36 = arith.subf %35, %34 : vector<128x1xf32>
    %37 = arith.mulf %33, %36 : vector<128x1xf32>
    %38 = vector.broadcast %37 : vector<128x1xf32> to vector<128x32xf32>
    %39 = arith.mulf %18, %38 : vector<128x32xf32>
    %c0_22 = arith.constant 0 : index
    %c0_23 = arith.constant 0 : index
    %40 = vector.load %arg8[%c0_22, %c0_23] : memref<128x32xf32, #tpu.memory_space<vmem>>, vector<128x32xf32>
    tpu.vector_store %arg8[%c0_22, %c0_23], %39 {strides = array<i32>} : memref<128x32xf32, #tpu.memory_space<vmem>>, vector<128x32xf32>,
    return
  }
  func.func @transform_0(%arg0: i32) -> (i32, i32) {
    %c0_i32 = arith.constant 0 : i32
    %c0_i32_0 = arith.constant 0 : i32
    return %arg0, %c0_i32 : i32, i32
  }
  func.func @transform_1(%arg0: i32) -> (i32, i32) {
    %c0_i32 = arith.constant 0 : i32
    %c0_i32_0 = arith.constant 0 : i32
    return %arg0, %c0_i32 : i32, i32
  }
  func.func @transform_2(%arg0: i32) -> (i32, i32) {
    %c0_i32 = arith.constant 0 : i32
    %c0_i32_0 = arith.constant 0 : i32
    %c0_i32_1 = arith.constant 0 : i32
    return %c0_i32, %c0_i32_0 : i32, i32
  }
  func.func @transform_3(%arg0: i32) -> (i32, i32) {
    %c0_i32 = arith.constant 0 : i32
    %c0_i32_0 = arith.constant 0 : i32
    %c0_i32_1 = arith.constant 0 : i32
    return %c0_i32, %c0_i32_0 : i32, i32
  }
  func.func @transform_4(%arg0: i32) -> (i32, i32) {
    %c0_i32 = arith.constant 0 : i32
    %c0_i32_0 = arith.constant 0 : i32
    %c0_i32_1 = arith.constant 0 : i32
    return %c0_i32, %c0_i32_0 : i32, i32
  }
  func.func @transform_5(%arg0: i32) -> (i32, i32) {
    %c0_i32 = arith.constant 0 : i32
    %c0_i32_0 = arith.constant 0 : i32
    %c0_i32_1 = arith.constant 0 : i32
    return %c0_i32, %c0_i32_0 : i32, i32
  }
  func.func @transform_6(%arg0: i32) -> (i32, i32) {
    %c0_i32 = arith.constant 0 : i32
    %c0_i32_0 = arith.constant 0 : i32
    %c0_i32_1 = arith.constant 0 : i32
    return %c0_i32, %c0_i32_0 : i32, i32
  }
  func.func @transform_7(%arg0: i32) -> (i32, i32) {
    %c0_i32 = arith.constant 0 : i32
    %c0_i32_0 = arith.constant 0 : i32
    return %arg0, %c0_i32 : i32, i32
  }
}

</mosaic_0001>

<llo_original>
// kernel: tpu_custom_call.1
$region0: #{tpu_custom_call.1}
  #allocation0 [shape = 'u32[]', space=smem, size = 0x4, offset = 0x4, fixed_abs, tag = 'smem constant byte address 0x4 - core index']
  #allocation1 [shape = 'u32[144,128]{1,0:T(1,128)}', space=vmem, size = 0x12000, scoped, tag = 'internal scratch']
  %s0 = inlined_call_operand.vmem [shape: f32[300,32], index: 0, kind: input, shape index: {}]
  %s1 = inlined_call_operand.vmem [shape: f32[300,1], index: 1, kind: input, shape index: {}]
  %s2 = inlined_call_operand.vmem [shape: f32[32,64], index: 2, kind: input, shape index: {}]
  %s3 = inlined_call_operand.vmem [shape: f32[1,64], index: 3, kind: input, shape index: {}]
  %s4 = inlined_call_operand.vmem [shape: f32[1,64], index: 4, kind: input, shape index: {}]
  %s5 = inlined_call_operand.vmem [shape: f32[64,32], index: 5, kind: input, shape index: {}]
  %s6 = inlined_call_operand.vmem [shape: f32[1,32], index: 6, kind: input, shape index: {}]
  %s7 = inlined_call_operand.vmem [shape: f32[300,32], index: 7, kind: output, shape index: {}]
  %s8 = sld [smem:[#allocation0]]
  $region109: #{tpu_custom_call.1} parent=0
    _
  %s10 = ssub.s32 1, %s8
  %s11 = scalar_select 0, %s10, %s8
  $region1: #{tpu_custom_call.1} parent=0
    #allocation2 [shape = 'u8[131072]{0}', space=vmem, size = 0x20000, scoped, tag = 'output window, operand 0']
    loop: start=0, step=1, limit=5
    $region2: #{tpu_custom_call.1} parent=1 // loop_pre_header
      _
    $region3: #{tpu_custom_call.1} parent=1 // loop_header
      %s13 = sphi 0, %s17
      %p14 = scmp.ge.s32.totalorder %s13, 5
      %s23 = sphi 0, %s25
      %s26 = sphi 0, %s23
      %s27 = sphi 0, %s26
      %s43 = sphi 0, %s27
      %s49 = sphi 0, %s51
      %s52 = sphi 0, %s49
      %s53 = sphi 0, %s52
      %s69 = sphi 0, %s53
      %s73 = sphi 0, %s73
      %s75 = sphi 0, %s73
      %s76 = sphi 0, %s75
      %s90 = sphi 0, %s76
      %s94 = sphi 0, %s94
      %s96 = sphi 0, %s94
      %s97 = sphi 0, %s96
      %s111 = sphi 0, %s97
      %s115 = sphi 0, %s115
      %s117 = sphi 0, %s115
      %s118 = sphi 0, %s117
      %s132 = sphi 0, %s118
      %s136 = sphi 0, %s136
      %s138 = sphi 0, %s136
      %s139 = sphi 0, %s138
      %s153 = sphi 0, %s139
      %s157 = sphi 0, %s157
      %s159 = sphi 0, %s157
      %s160 = sphi 0, %s159
      %s174 = sphi 0, %s160
      %s180 = sphi 0, %s182
      %s183 = sphi 0, %s180
      %s184 = sphi 0, %s183
      %s200 = sphi 0, %s184
    $region4: #{tpu_custom_call.1} parent=1 // loop_header_branch
      %16 = sbr.rel (%p14) target = $region8
    $region5: #{tpu_custom_call.1} parent=1 // loop_body
      %s18 = ssub.s32 %s13, 1
      %s19 = ssub.s32 %s13, 2
      %s20 = sadd.s32 %s13, 1
      %s21 = ssub.s32 %s13, %s20
      %p22 = scmp.eq.s32.totalorder %s21, 0
      %s24 = sadd.s32 %s23, 1
      %s25 = scalar_select %p22, %s23, %s24
      %p28 = pneg %p22
      %p29 = scmp.eq.s32.totalorder %s13, 2
      %p30 = por %p28, %p29
      %p31 = scmp.ne.s32.totalorder %s23, %s26
      %p32 = scmp.eq.s32.totalorder %s13, 0
      %p33 = por %p31, %p32
      %p34 = scmp.ne.s32.totalorder %s23, %s26
      %p35 = scmp.eq.s32.totalorder %s18, 2
      %p36 = por %p34, %p35
      %p37 = scmp.ne.s32.totalorder %s26, %s27
      %p38 = scmp.eq.s32.totalorder %s18, 0
      %p39 = por %p37, %p38
      %p40 = scmp.ne.s32.totalorder %s26, %s27
      %p41 = scmp.eq.s32.totalorder %s19, 2
      %p42 = por %p40, %p41
      %p44 = scmp.ne.s32.totalorder %s27, %s43
      %p45 = scmp.eq.s32.totalorder %s19, 0
      %p46 = por %p44, %p45
      %s47 = ssub.s32 %s13, %s20
      %p48 = scmp.eq.s32.totalorder %s47, 0
      %s50 = sadd.s32 %s49, 1
      %s51 = scalar_select %p48, %s49, %s50
      %p54 = pneg %p48
      %p55 = scmp.eq.s32.totalorder %s13, 2
      %p56 = por %p54, %p55
      %p57 = scmp.ne.s32.totalorder %s49, %s52
      %p58 = scmp.eq.s32.totalorder %s13, 0
      %p59 = por %p57, %p58
      %p60 = scmp.ne.s32.totalorder %s49, %s52
      %p61 = scmp.eq.s32.totalorder %s18, 2
      %p62 = por %p60, %p61
      %p63 = scmp.ne.s32.totalorder %s52, %s53
      %p64 = scmp.eq.s32.totalorder %s18, 0
      %p65 = por %p63, %p64
      %p66 = scmp.ne.s32.totalorder %s52, %s53
      %p67 = scmp.eq.s32.totalorder %s19, 2
      %p68 = por %p66, %p67
      %p70 = scmp.ne.s32.totalorder %s53, %s69
      %p71 = scmp.eq.s32.totalorder %s19, 0
      %p72 = por %p70, %p71
      %s74 = sadd.s32 %s73, 1
      %p77 = scmp.eq.s32.totalorder %s13, 2
      %p78 = scmp.ne.s32.totalorder %s73, %s75
      %p79 = scmp.eq.s32.totalorder %s13, 0
      %p80 = por %p78, %p79
      %p81 = scmp.ne.s32.totalorder %s73, %s75
      %p82 = scmp.eq.s32.totalorder %s18, 2
      %p83 = por %p81, %p82
      %p84 = scmp.ne.s32.totalorder %s75, %s76
      %p85 = scmp.eq.s32.totalorder %s18, 0
      %p86 = por %p84, %p85
      %p87 = scmp.ne.s32.totalorder %s75, %s76
      %p88 = scmp.eq.s32.totalorder %s19, 2
      %p89 = por %p87, %p88
      %p91 = scmp.ne.s32.totalorder %s76, %s90
      %p92 = scmp.eq.s32.totalorder %s19, 0
      %p93 = por %p91, %p92
      %s95 = sadd.s32 %s94, 1
      %p98 = scmp.eq.s32.totalorder %s13, 2
      %p99 = scmp.ne.s32.totalorder %s94, %s96
      %p100 = scmp.eq.s32.totalorder %s13, 0
      %p101 = por %p99, %p100
      %p102 = scmp.ne.s32.totalorder %s94, %s96
      %p103 = scmp.eq.s32.totalorder %s18, 2
      %p104 = por %p102, %p103
      %p105 = scmp.ne.s32.totalorder %s96, %s97
      %p106 = scmp.eq.s32.totalorder %s18, 0
      %p107 = por %p105, %p106
      %p108 = scmp.ne.s32.totalorder %s96, %s97
      %p109 = scmp.eq.s32.totalorder %s19, 2
      %p110 = por %p108, %p109
      %p112 = scmp.ne.s32.totalorder %s97, %s111
      %p113 = scmp.eq.s32.totalorder %s19, 0
      %p114 = por %p112, %p113
      %s116 = sadd.s32 %s115, 1
      %p119 = scmp.eq.s32.totalorder %s13, 2
      %p120 = scmp.ne.s32.totalorder %s115, %s117
      %p121 = scmp.eq.s32.totalorder %s13, 0
      %p122 = por %p120, %p121
      %p123 = scmp.ne.s32.totalorder %s115, %s117
      %p124 = scmp.eq.s32.totalorder %s18, 2
      %p125 = por %p123, %p124
      %p126 = scmp.ne.s32.totalorder %s117, %s118
      %p127 = scmp.eq.s32.totalorder %s18, 0
      %p128 = por %p126, %p127
      %p129 = scmp.ne.s32.totalorder %s117, %s118
      %p130 = scmp.eq.s32.totalorder %s19, 2
      %p131 = por %p129, %p130
      %p133 = scmp.ne.s32.totalorder %s118, %s132
      %p134 = scmp.eq.s32.totalorder %s19, 0
      %p135 = por %p133, %p134
      %s137 = sadd.s32 %s136, 1
      %p140 = scmp.eq.s32.totalorder %s13, 2
      %p141 = scmp.ne.s32.totalorder %s136, %s138
      %p142 = scmp.eq.s32.totalorder %s13, 0
      %p143 = por %p141, %p142
      %p144 = scmp.ne.s32.totalorder %s136, %s138
      %p145 = scmp.eq.s32.totalorder %s18, 2
      %p146 = por %p144, %p145
      %p147 = scmp.ne.s32.totalorder %s138, %s139
      %p148 = scmp.eq.s32.totalorder %s18, 0
      %p149 = por %p147, %p148
      %p150 = scmp.ne.s32.totalorder %s138, %s139
      %p151 = scmp.eq.s32.totalorder %s19, 2
      %p152 = por %p150, %p151
      %p154 = scmp.ne.s32.totalorder %s139, %s153
      %p155 = scmp.eq.s32.totalorder %s19, 0
      %p156 = por %p154, %p155
      %s158 = sadd.s32 %s157, 1
      %p161 = scmp.eq.s32.totalorder %s13, 2
      %p162 = scmp.ne.s32.totalorder %s157, %s159
      %p163 = scmp.eq.s32.totalorder %s13, 0
      %p164 = por %p162, %p163
      %p165 = scmp.ne.s32.totalorder %s157, %s159
      %p166 = scmp.eq.s32.totalorder %s18, 2
      %p167 = por %p165, %p166
      %p168 = scmp.ne.s32.totalorder %s159, %s160
      %p169 = scmp.eq.s32.totalorder %s18, 0
      %p170 = por %p168, %p169
      %p171 = scmp.ne.s32.totalorder %s159, %s160
      %p172 = scmp.eq.s32.totalorder %s19, 2
      %p173 = por %p171, %p172
      %p175 = scmp.ne.s32.totalorder %s160, %s174
      %p176 = scmp.eq.s32.totalorder %s19, 0
      %p177 = por %p175, %p176
      %s178 = ssub.s32 %s13, %s20
      %p179 = scmp.eq.s32.totalorder %s178, 0
      %s181 = sadd.s32 %s180, 1
      %s182 = scalar_select %p179, %s180, %s181
      %p185 = pneg %p179
      %p186 = scmp.eq.s32.totalorder %s13, 2
      %p187 = por %p185, %p186
      %p188 = scmp.ne.s32.totalorder %s180, %s183
      %p189 = scmp.eq.s32.totalorder %s13, 0
      %p190 = por %p188, %p189
      %p191 = scmp.ne.s32.totalorder %s180, %s183
      %p192 = scmp.eq.s32.totalorder %s18, 2
      %p193 = por %p191, %p192
      %p194 = scmp.ne.s32.totalorder %s183, %s184
      %p195 = scmp.eq.s32.totalorder %s18, 0
      %p196 = por %p194, %p195
      %p197 = scmp.ne.s32.totalorder %s183, %s184
      %p198 = scmp.eq.s32.totalorder %s19, 2
      %p199 = por %p197, %p198
      %p201 = scmp.ne.s32.totalorder %s184, %s200
      %p202 = scmp.eq.s32.totalorder %s19, 0
      %p203 = por %p201, %p202
      %p204 = scmp.le.s32.totalorder 1, %s13
      %p205 = scmp.lt.s32.totalorder %s13, 4
      %p206 = pnand %p204, %p205
      %p207 = pneg %p206
      // Predicated region
      $region9: #{tpu_custom_call.1} parent=5 // pred_check
        _
      $region10: #{tpu_custom_call.1} parent=5 // pred_check_branch
        %209 = sbr.rel (%p206) target = $region12
      $region11: #{tpu_custom_call.1} parent=5 // pred_region
        %s210 = ssub.s32 %s13, 1
        // Predicated region
        $region13: #{tpu_custom_call.1} parent=11 // pred_check
          %p211 = pneg %p86
        $region14: #{tpu_custom_call.1} parent=11 // pred_check_branch
          %213 = sbr.rel (%p211) target = $region16
        $region15: #{tpu_custom_call.1} parent=11 // pred_region
          _
        $region16: #{tpu_custom_call.1} parent=11 // pred_fallthru
          _
        // Predicated region
        $region17: #{tpu_custom_call.1} parent=11 // pred_check
          %p214 = pneg %p107
        $region18: #{tpu_custom_call.1} parent=11 // pred_check_branch
          %216 = sbr.rel (%p214) target = $region20
        $region19: #{tpu_custom_call.1} parent=11 // pred_region
          _
        $region20: #{tpu_custom_call.1} parent=11 // pred_fallthru
          _
        // Predicated region
        $region21: #{tpu_custom_call.1} parent=11 // pred_check
          %p217 = pneg %p128
        $region22: #{tpu_custom_call.1} parent=11 // pred_check_branch
          %219 = sbr.rel (%p217) target = $region24
        $region23: #{tpu_custom_call.1} parent=11 // pred_region
          _
        $region24: #{tpu_custom_call.1} parent=11 // pred_fallthru
          _
        // Predicated region
        $region25: #{tpu_custom_call.1} parent=11 // pred_check
          %p220 = pneg %p149
        $region26: #{tpu_custom_call.1} parent=11 // pred_check_branch
          %222 = sbr.rel (%p220) target = $region28
        $region27: #{tpu_custom_call.1} parent=11 // pred_region
          _
        $region28: #{tpu_custom_call.1} parent=11 // pred_fallthru
          _
        // Predicated region
        $region29: #{tpu_custom_call.1} parent=11 // pred_check
          %p223 = pneg %p170
        $region30: #{tpu_custom_call.1} parent=11 // pred_check_branch
          %225 = sbr.rel (%p223) target = $region32
        $region31: #{tpu_custom_call.1} parent=11 // pred_region
          _
        $region32: #{tpu_custom_call.1} parent=11 // pred_fallthru
          _
      $region12: #{tpu_custom_call.1} parent=5 // pred_fallthru
        _
      %p226 = scmp.lt.s32.totalorder %s13, 3
      // Predicated region
      $region33: #{tpu_custom_call.1} parent=5 // pred_check
        %p227 = pneg %p226
      $region34: #{tpu_custom_call.1} parent=5 // pred_check_branch
        %229 = sbr.rel (%p227) target = $region36
      $region35: #{tpu_custom_call.1} parent=5 // pred_region
        // Predicated region
        $region37: #{tpu_custom_call.1} parent=35 // pred_check
          %p230 = pneg %p33
        $region38: #{tpu_custom_call.1} parent=35 // pred_check_branch
          %232 = sbr.rel (%p230) target = $region40
        $region39: #{tpu_custom_call.1} parent=35 // pred_region
          %s233 = smul.u32 16, %s13
          %s234 = ssub.s32 38, %s233
          %p235 = scmp.lt.s32.totalorder %s234, 16
          %s236 = scalar_select %p235, %s234, 16
          %s237 = smul.u32 128, %s236
          %p238 = scmp.lt.s32.totalorder %s233, 37
          %s239 = scalar_select %p238, %s233, 37
          %s240 = smul.addr %s239, 8
          %s241 = scalar_lea.vmem %s0, %s240
          %s242 = smul.u32 16, %s13
          %s243 = ssub.s32 38, %s242
          %p244 = scmp.lt.s32.totalorder %s243, 16
          %s245 = scalar_select %p244, %s243, 16
          %s246 = smul.u32 128, %s245
        $region40: #{tpu_custom_call.1} parent=35 // pred_fallthru
          _
        // Predicated region
        $region41: #{tpu_custom_call.1} parent=35 // pred_check
          %p247 = pneg %p59
        $region42: #{tpu_custom_call.1} parent=35 // pred_check_branch
          %249 = sbr.rel (%p247) target = $region44
        $region43: #{tpu_custom_call.1} parent=35 // pred_region
          %s250 = smul.u32 16, %s13
          %s251 = ssub.s32 38, %s250
          %p252 = scmp.lt.s32.totalorder %s251, 16
          %s253 = scalar_select %p252, %s251, 16
          %s254 = smul.u32 128, %s253
          %p255 = scmp.lt.s32.totalorder %s250, 37
          %s256 = scalar_select %p255, %s250, 37
          %s257 = smul.addr %s256, 8
          %s258 = scalar_lea.vmem %s1, %s257
          %s259 = smul.u32 16, %s13
          %s260 = ssub.s32 38, %s259
          %p261 = scmp.lt.s32.totalorder %s260, 16
          %s262 = scalar_select %p261, %s260, 16
          %s263 = smul.u32 128, %s262
        $region44: #{tpu_custom_call.1} parent=35 // pred_fallthru
          _
      $region36: #{tpu_custom_call.1} parent=5 // pred_fallthru
        _
      %p264 = scmp.le.s32.totalorder 1, %s13
      %p265 = scmp.lt.s32.totalorder %s13, 4
      %p266 = pnand %p264, %p265
      %p267 = pneg %p266
      // Predicated region
      $region45: #{tpu_custom_call.1} parent=5 // pred_check
        _
      $region46: #{tpu_custom_call.1} parent=5 // pred_check_branch
        %269 = sbr.rel (%p266) target = $region48
      $region47: #{tpu_custom_call.1} parent=5 // pred_region
        %s270 = ssub.s32 %s13, 1
        %s271 = smul.u32 16, %s18
        %s272 = ssub.s32 38, %s271
        %p273 = scmp.lt.s32.totalorder %s272, 16
        %s274 = scalar_select %p273, %s272, 16
        %s275 = smul.u32 128, %s274
        %p276 = scmp.lt.s32.totalorder %s271, 37
        %s277 = scalar_select %p276, %s271, 37
        %s278 = smul.addr %s277, 8
        %s279 = scalar_lea.vmem %s0, %s278
        %p280 = pneg %p39
        %p281 = pneg %p36
        %s282 = smul.u32 16, %s18
        %s283 = ssub.s32 38, %s282
        %p284 = scmp.lt.s32.totalorder %s283, 16
        %s285 = scalar_select %p284, %s283, 16
        %s286 = smul.u32 128, %s285
        %p287 = scmp.lt.s32.totalorder %s282, 37
        %s288 = scalar_select %p287, %s282, 37
        %s289 = smul.addr %s288, 8
        %s290 = scalar_lea.vmem %s1, %s289
        %p291 = pneg %p65
        %p292 = pneg %p62
        %p293 = pneg %p86
        %p294 = pneg %p83
        %p295 = pneg %p107
        %p296 = pneg %p104
        %p297 = pneg %p128
        %p298 = pneg %p125
        %p299 = pneg %p149
        %p300 = pneg %p146
        %p301 = pneg %p170
        %p302 = pneg %p167
        %p303 = pneg %p196
        %p304 = pneg %p193
        %s305 = sand.u32 %s183, 1
        %s306 = sand.u32 %s183, 1
        %s307 = smul.addr %s306, 128
        %s308 = scalar_lea.vmem [#allocation2], %s307
        %s309 = smul.u32 16, %s18
        %s310 = ssub.s32 38, %s309
        %p311 = scmp.lt.s32.totalorder %s310, 16
        %s312 = scalar_select %p311, %s310, 16
        %s313 = smul.u32 128, %s312
        %p314 = scmp.lt.s32.totalorder %s309, 37
        %s315 = scalar_select %p314, %s309, 37
        %s316 = smul.addr %s315, 8
        %s317 = scalar_lea.vmem %s0, %s316
        %s318 = smul.u32 16, %s18
        %s319 = ssub.s32 38, %s318
        %p320 = scmp.lt.s32.totalorder %s319, 16
        %s321 = scalar_select %p320, %s319, 16
        %s322 = smul.u32 128, %s321
        %s323 = smul.u32 16, %s18
        %s324 = ssub.s32 38, %s323
        %p325 = scmp.lt.s32.totalorder %s324, 16
        %s326 = scalar_select %p325, %s324, 16
        %s327 = smul.u32 128, %s326
        %p328 = scmp.lt.s32.totalorder %s323, 37
        %s329 = scalar_select %p328, %s323, 37
        %s330 = smul.addr %s329, 8
        %s331 = scalar_lea.vmem %s1, %s330
        %s332 = smul.u32 16, %s18
        %s333 = ssub.s32 38, %s332
        %p334 = scmp.lt.s32.totalorder %s333, 16
        %s335 = scalar_select %p334, %s333, 16
        %s336 = smul.u32 128, %s335
        %s337 = smul.u32 16, %s18
        %s338 = ssub.s32 38, %s337
        %p339 = scmp.lt.s32.totalorder %s338, 16
        %s340 = scalar_select %p339, %s338, 16
        %s341 = smul.u32 128, %s340
        %v342 = vld [vmem:[%s317] sm:$0xff]
        %v343 = vld [vmem:[%s317 + $0x8] sm:$0xff]
        %v344 = vld [vmem:[%s317 + $0x10] sm:$0xff]
        %v345 = vld [vmem:[%s317 + $0x18] sm:$0xff]
        %v346 = vld [vmem:[%s317 + $0x20] sm:$0xff]
        %v347 = vld [vmem:[%s317 + $0x28] sm:$0xff]
        %v348 = vld [vmem:[%s317 + $0x30] sm:$0xff]
        %v349 = vld [vmem:[%s317 + $0x38] sm:$0xff]
        %v350 = vld [vmem:[%s317 + $0x40] sm:$0xff]
        %v351 = vld [vmem:[%s317 + $0x48] sm:$0xff]
        %v352 = vld [vmem:[%s317 + $0x50] sm:$0xff]
        %v353 = vld [vmem:[%s317 + $0x58] sm:$0xff]
        %v354 = vld [vmem:[%s317 + $0x60] sm:$0xff]
        %v355 = vld [vmem:[%s317 + $0x68] sm:$0xff]
        %v356 = vld [vmem:[%s317 + $0x70] sm:$0xff]
        %v357 = vld [vmem:[%s317 + $0x78] sm:$0xff]
        %v358 = vld [vmem:[%s331] sm:$0xff]
        %v359 = vld [vmem:[%s331 + $0x8] sm:$0xff]
        %v360 = vld [vmem:[%s331 + $0x10] sm:$0xff]
        %v361 = vld [vmem:[%s331 + $0x18] sm:$0xff]
        %v362 = vld [vmem:[%s331 + $0x20] sm:$0xff]
        %v363 = vld [vmem:[%s331 + $0x28] sm:$0xff]
        %v364 = vld [vmem:[%s331 + $0x30] sm:$0xff]
        %v365 = vld [vmem:[%s331 + $0x38] sm:$0xff]
        %v366 = vld [vmem:[%s331 + $0x40] sm:$0xff]
        %v367 = vld [vmem:[%s331 + $0x48] sm:$0xff]
        %v368 = vld [vmem:[%s331 + $0x50] sm:$0xff]
        %v369 = vld [vmem:[%s331 + $0x58] sm:$0xff]
        %v370 = vld [vmem:[%s331 + $0x60] sm:$0xff]
        %v371 = vld [vmem:[%s331 + $0x68] sm:$0xff]
        %v372 = vld [vmem:[%s331 + $0x70] sm:$0xff]
        %v373 = vld [vmem:[%s331 + $0x78] sm:$0xff]
        %v374 = vld [vmem:[%s2] sm:$0xff]
        %v375 = vld [vmem:[%s2 + $0x8] sm:$0xff]
        %v376 = vld [vmem:[%s2 + $0x10] sm:$0xff]
        %v377 = vld [vmem:[%s2 + $0x18] sm:$0xff]
        %v378 = vld [vmem:[%s3] sm:$0x1]
        %380 = vset.pattern.permute.xlu0 0
        %381 = vperm.xlu0 %380, %v358
        %v382 = vpop.permute.xlu0 %381
        %385 = vset.pattern.permute.xlu0 0
        %386 = vperm.xlu0 %385, %v359
        %v387 = vpop.permute.xlu0 %386
        %390 = vset.pattern.permute.xlu0 0
        %391 = vperm.xlu0 %390, %v360
        %v392 = vpop.permute.xlu0 %391
        %395 = vset.pattern.permute.xlu0 0
        %396 = vperm.xlu0 %395, %v361
        %v397 = vpop.permute.xlu0 %396
        %400 = vset.pattern.permute.xlu0 0
        %401 = vperm.xlu0 %400, %v362
        %v402 = vpop.permute.xlu0 %401
        %405 = vset.pattern.permute.xlu0 0
        %406 = vperm.xlu0 %405, %v363
        %v407 = vpop.permute.xlu0 %406
        %410 = vset.pattern.permute.xlu0 0
        %411 = vperm.xlu0 %410, %v364
        %v412 = vpop.permute.xlu0 %411
        %415 = vset.pattern.permute.xlu0 0
        %416 = vperm.xlu0 %415, %v365
        %v417 = vpop.permute.xlu0 %416
        %420 = vset.pattern.permute.xlu0 0
        %421 = vperm.xlu0 %420, %v366
        %v422 = vpop.permute.xlu0 %421
        %425 = vset.pattern.permute.xlu0 0
        %426 = vperm.xlu0 %425, %v367
        %v427 = vpop.permute.xlu0 %426
        %430 = vset.pattern.permute.xlu0 0
        %431 = vperm.xlu0 %430, %v368
        %v432 = vpop.permute.xlu0 %431
        %435 = vset.pattern.permute.xlu0 0
        %436 = vperm.xlu0 %435, %v369
        %v437 = vpop.permute.xlu0 %436
        %440 = vset.pattern.permute.xlu0 0
        %441 = vperm.xlu0 %440, %v370
        %v442 = vpop.permute.xlu0 %441
        %445 = vset.pattern.permute.xlu0 0
        %446 = vperm.xlu0 %445, %v371
        %v447 = vpop.permute.xlu0 %446
        %450 = vset.pattern.permute.xlu0 0
        %451 = vperm.xlu0 %450, %v372
        %v452 = vpop.permute.xlu0 %451
        %455 = vset.pattern.permute.xlu0 0
        %456 = vperm.xlu0 %455, %v373
        %v457 = vpop.permute.xlu0 %456
        %v460 = vlaneseq
        %v461 = vshrl.u32 %v460, 7
        %v462 = vsub.s32 0, %v461
        %v463 = vrot.slane %v378, %v462
        %v465 = vmul.f32 %v382, %v463
        %v466 = vmul.f32 %v387, %v463
        %v467 = vmul.f32 %v392, %v463
        %v468 = vmul.f32 %v397, %v463
        %v469 = vmul.f32 %v402, %v463
        %v470 = vmul.f32 %v407, %v463
        %v471 = vmul.f32 %v412, %v463
        %v472 = vmul.f32 %v417, %v463
        %v473 = vmul.f32 %v422, %v463
        %v474 = vmul.f32 %v427, %v463
        %v475 = vmul.f32 %v432, %v463
        %v476 = vmul.f32 %v437, %v463
        %v477 = vmul.f32 %v442, %v463
        %v478 = vmul.f32 %v447, %v463
        %v479 = vmul.f32 %v452, %v463
        %v480 = vmul.f32 %v457, %v463
        %vm481 = vcmask 261120
        %v483 = vsel %vm481, %v342, 0
        %v486 = vsel %vm481, %v343, 0
        %v489 = vsel %vm481, %v344, 0
        %v492 = vsel %vm481, %v345, 0
        %v495 = vsel %vm481, %v346, 0
        %v498 = vsel %vm481, %v347, 0
        %v501 = vsel %vm481, %v348, 0
        %v504 = vsel %vm481, %v349, 0
        %v507 = vsel %vm481, %v350, 0
        %v510 = vsel %vm481, %v351, 0
        %v513 = vsel %vm481, %v352, 0
        %v516 = vsel %vm481, %v353, 0
        %v519 = vsel %vm481, %v354, 0
        %v522 = vsel %vm481, %v355, 0
        %v525 = vsel %vm481, %v356, 0
        %v528 = vsel %vm481, %v357, 0
        %530 = vmatprep.subr.mxu0 0.0
        %531 = vmatpush1.msra.mxu0 0.0
        %532 = vmatprep.subr.mxu0 0.0
        %533 = vmatpush1.msra.mxu0 0.0
        %534 = vmatprep.subr.mxu0 0.0
        %535 = vmatpush1.msra.mxu0 0.0
        %536 = vmatprep.subr.mxu0 0.0
        %537 = vmatpush1.msra.mxu0 0.0
        %538 = vmatprep.subr.mxu0 0.0
        %539 = vmatpush1.msra.mxu0 0.0
        %540 = vmatprep.subr.mxu0 0.0
        %541 = vmatpush1.msra.mxu0 0.0
        %542 = vmatprep.subr.mxu0 0.0
        %543 = vmatpush1.msra.mxu0 0.0
        %544 = vmatprep.subr.mxu0 0.0
        %545 = vmatpush1.msra.mxu0 0.0
        %546 = vmatprep.subr.mxu0 0.0
        %547 = vmatpush1.msra.mxu0 0.0
        %548 = vmatprep.subr.mxu0 0.0
        %549 = vmatpush1.msra.mxu0 0.0
        %550 = vmatprep.subr.mxu0 0.0
        %551 = vmatpush1.msra.mxu0 0.0
        %552 = vmatprep.subr.mxu0 0.0
        %553 = vmatpush1.msra.mxu0 0.0
        %554 = vmatprep.subr.mxu0 0.0
        %555 = vmatpush1.msra.mxu0 %v377
        %556 = vmatprep.subr.mxu0 0.0
        %557 = vmatpush1.msra.mxu0 %v376
        %558 = vmatprep.subr.mxu0 0.0
        %559 = vmatpush1.msra.mxu0 %v375
        %560 = vmatprep.subr.mxu0 0.0
        %561 = vmatpush1.msra.mxu0 %v374
        %562 = vmatprep.subr.mxu0 0.0
        %563 = vmatpush2.msra.mxu0 0.0
        %564 = vmatprep.subr.mxu0 0.0
        %565 = vmatpush2.msra.mxu0 0.0
        %566 = vmatprep.subr.mxu0 0.0
        %567 = vmatpush2.msra.mxu0 0.0
        %568 = vmatprep.subr.mxu0 0.0
        %569 = vmatpush2.msra.mxu0 0.0
        %570 = vmatprep.subr.mxu0 0.0
        %571 = vmatpush2.msra.mxu0 0.0
        %572 = vmatprep.subr.mxu0 0.0
        %573 = vmatpush2.msra.mxu0 0.0
        %574 = vmatprep.subr.mxu0 0.0
        %575 = vmatpush2.msra.mxu0 0.0
        %576 = vmatprep.subr.mxu0 0.0
        %577 = vmatpush2.msra.mxu0 0.0
        %578 = vmatprep.subr.mxu0 0.0
        %579 = vmatpush2.msra.mxu0 0.0
        %580 = vmatprep.subr.mxu0 0.0
        %581 = vmatpush2.msra.mxu0 0.0
        %582 = vmatprep.subr.mxu0 0.0
        %583 = vmatpush2.msra.mxu0 0.0
        %584 = vmatprep.subr.mxu0 0.0
        %585 = vmatpush2.msra.mxu0 0.0
        %586 = vmatprep.subr.mxu0 0.0
        %587 = vmatpush2.msra.mxu0 0.0
        %588 = vmatprep.subr.mxu0 0.0
        %589 = vmatpush2.msra.mxu0 0.0
        %590 = vmatprep.subr.mxu0 0.0
        %591 = vmatpush2.msra.mxu0 0.0
        %592 = vmatprep.subr.mxu0 0.0
        %593 = vmatpush2.msra.mxu0 0.0
        %594 = vmatprep.mubr.f32.mxu0 0.0
        %595 = vmatmul.mubr.f32.gmra.mxu0 %v483
        %v596 = vpop.f32.mrf.mxu0
        %v597 = vadd.f32 %v465, %v596
        %v598 = vpop.f32.mrf.mxu0
        %599 = vmatprep.mubr.f32.mxu0 0.0
        %600 = vmatmul.mubr.f32.gmra.mxu0 %v486
        %v601 = vpop.f32.mrf.mxu0
        %v602 = vadd.f32 %v466, %v601
        %v603 = vpop.f32.mrf.mxu0
        %604 = vmatprep.mubr.f32.mxu0 0.0
        %605 = vmatmul.mubr.f32.gmra.mxu0 %v489
        %v606 = vpop.f32.mrf.mxu0
        %v607 = vadd.f32 %v467, %v606
        %v608 = vpop.f32.mrf.mxu0
        %609 = vmatprep.mubr.f32.mxu0 0.0
        %610 = vmatmul.mubr.f32.gmra.mxu0 %v492
        %v611 = vpop.f32.mrf.mxu0
        %v612 = vadd.f32 %v468, %v611
        %v613 = vpop.f32.mrf.mxu0
        %614 = vmatprep.mubr.f32.mxu0 0.0
        %615 = vmatmul.mubr.f32.gmra.mxu0 %v495
        %v616 = vpop.f32.mrf.mxu0
        %v617 = vadd.f32 %v469, %v616
        %v618 = vpop.f32.mrf.mxu0
        %619 = vmatprep.mubr.f32.mxu0 0.0
        %620 = vmatmul.mubr.f32.gmra.mxu0 %v498
        %v621 = vpop.f32.mrf.mxu0
        %v622 = vadd.f32 %v470, %v621
        %v623 = vpop.f32.mrf.mxu0
        %624 = vmatprep.mubr.f32.mxu0 0.0
        %625 = vmatmul.mubr.f32.gmra.mxu0 %v501
        %v626 = vpop.f32.mrf.mxu0
        %v627 = vadd.f32 %v471, %v626
        %v628 = vpop.f32.mrf.mxu0
        %629 = vmatprep.mubr.f32.mxu0 0.0
        %630 = vmatmul.mubr.f32.gmra.mxu0 %v504
        %v631 = vpop.f32.mrf.mxu0
        %v632 = vadd.f32 %v472, %v631
        %v633 = vpop.f32.mrf.mxu0
        %634 = vmatprep.mubr.f32.mxu0 0.0
        %635 = vmatmul.mubr.f32.gmra.mxu0 %v507
        %v636 = vpop.f32.mrf.mxu0
        %v637 = vadd.f32 %v473, %v636
        %v638 = vpop.f32.mrf.mxu0
        %639 = vmatprep.mubr.f32.mxu0 0.0
        %640 = vmatmul.mubr.f32.gmra.mxu0 %v510
        %v641 = vpop.f32.mrf.mxu0
        %v642 = vadd.f32 %v474, %v641
        %v643 = vpop.f32.mrf.mxu0
        %644 = vmatprep.mubr.f32.mxu0 0.0
        %645 = vmatmul.mubr.f32.gmra.mxu0 %v513
        %v646 = vpop.f32.mrf.mxu0
        %v647 = vadd.f32 %v475, %v646
        %v648 = vpop.f32.mrf.mxu0
        %649 = vmatprep.mubr.f32.mxu0 0.0
        %650 = vmatmul.mubr.f32.gmra.mxu0 %v516
        %v651 = vpop.f32.mrf.mxu0
        %v652 = vadd.f32 %v476, %v651
        %v653 = vpop.f32.mrf.mxu0
        %654 = vmatprep.mubr.f32.mxu0 0.0
        %655 = vmatmul.mubr.f32.gmra.mxu0 %v519
        %v656 = vpop.f32.mrf.mxu0
        %v657 = vadd.f32 %v477, %v656
        %v658 = vpop.f32.mrf.mxu0
        %659 = vmatprep.mubr.f32.mxu0 0.0
        %660 = vmatmul.mubr.f32.gmra.mxu0 %v522
        %v661 = vpop.f32.mrf.mxu0
        %v662 = vadd.f32 %v478, %v661
        %v663 = vpop.f32.mrf.mxu0
        %664 = vmatprep.mubr.f32.mxu0 0.0
        %665 = vmatmul.mubr.f32.gmra.mxu0 %v525
        %v666 = vpop.f32.mrf.mxu0
        %v667 = vadd.f32 %v479, %v666
        %v668 = vpop.f32.mrf.mxu0
        %669 = vmatprep.mubr.f32.mxu0 0.0
        %670 = vmatmul.mubr.f32.gmra.mxu0 %v528
        %v671 = vpop.f32.mrf.mxu0
        %v672 = vadd.f32 %v480, %v671
        %v673 = vpop.f32.mrf.mxu0
        %674 = vdwg.mxu0
        %v675 = vld [vmem:[%s4] sm:$0x1]
        %v677 = vlaneseq
        %v678 = vshrl.u32 %v677, 7
        %v679 = vsub.s32 0, %v678
        %v680 = vrot.slane %v675, %v679
        %v682 = vadd.f32 %v597, %v680
        %v683 = vadd.f32 %v602, %v680
        %v684 = vadd.f32 %v607, %v680
        %v685 = vadd.f32 %v612, %v680
        %v686 = vadd.f32 %v617, %v680
        %v687 = vadd.f32 %v622, %v680
        %v688 = vadd.f32 %v627, %v680
        %v689 = vadd.f32 %v632, %v680
        %v690 = vadd.f32 %v637, %v680
        %v691 = vadd.f32 %v642, %v680
        %v692 = vadd.f32 %v647, %v680
        %v693 = vadd.f32 %v652, %v680
        %v694 = vadd.f32 %v657, %v680
        %v695 = vadd.f32 %v662, %v680
        %v696 = vadd.f32 %v667, %v680
        %v697 = vadd.f32 %v672, %v680
        %v698 = vmax.f32 %v682, 0.0
        %v699 = vmax.f32 %v683, 0.0
        %v700 = vmax.f32 %v684, 0.0
        %v701 = vmax.f32 %v685, 0.0
        %v702 = vmax.f32 %v686, 0.0
        %v703 = vmax.f32 %v687, 0.0
        %v704 = vmax.f32 %v688, 0.0
        %v705 = vmax.f32 %v689, 0.0
        %v706 = vmax.f32 %v690, 0.0
        %v707 = vmax.f32 %v691, 0.0
        %v708 = vmax.f32 %v692, 0.0
        %v709 = vmax.f32 %v693, 0.0
        %v710 = vmax.f32 %v694, 0.0
        %v711 = vmax.f32 %v695, 0.0
        %v712 = vmax.f32 %v696, 0.0
        %v713 = vmax.f32 %v697, 0.0
        %v714 = vld [vmem:[%s5] sm:$0xff]
        %v715 = vld [vmem:[%s5 + $0x8] sm:$0xff]
        %v716 = vld [vmem:[%s5 + $0x10] sm:$0xff]
        %v717 = vld [vmem:[%s5 + $0x18] sm:$0xff]
        %v718 = vld [vmem:[%s5 + $0x20] sm:$0xff]
        %v719 = vld [vmem:[%s5 + $0x28] sm:$0xff]
        %v720 = vld [vmem:[%s5 + $0x30] sm:$0xff]
        %v721 = vld [vmem:[%s5 + $0x38] sm:$0xff]
        %v722 = vld [vmem:[%s6] sm:$0x1]
        %v724 = vlaneseq
        %v725 = vshrl.u32 %v724, 7
        %v726 = vsub.s32 0, %v725
        %v727 = vrot.slane %v722, %v726
        %vm729 = vcmask 523264
        %v731 = vsel %vm729, %v698, 0
        %v734 = vsel %vm729, %v699, 0
        %v737 = vsel %vm729, %v700, 0
        %v740 = vsel %vm729, %v701, 0
        %v743 = vsel %vm729, %v702, 0
        %v746 = vsel %vm729, %v703, 0
        %v749 = vsel %vm729, %v704, 0
        %v752 = vsel %vm729, %v705, 0
        %v755 = vsel %vm729, %v706, 0
        %v758 = vsel %vm729, %v707, 0
        %v761 = vsel %vm729, %v708, 0
        %v764 = vsel %vm729, %v709, 0
        %v767 = vsel %vm729, %v710, 0
        %v770 = vsel %vm729, %v711, 0
        %v773 = vsel %vm729, %v712, 0
        %v776 = vsel %vm729, %v713, 0
        %778 = vmatprep.subr.mxu0 0.0
        %779 = vmatpush1.msra.mxu0 0.0
        %780 = vmatprep.subr.mxu0 0.0
        %781 = vmatpush1.msra.mxu0 0.0
        %782 = vmatprep.subr.mxu0 0.0
        %783 = vmatpush1.msra.mxu0 0.0
        %784 = vmatprep.subr.mxu0 0.0
        %785 = vmatpush1.msra.mxu0 0.0
        %786 = vmatprep.subr.mxu0 0.0
        %787 = vmatpush1.msra.mxu0 0.0
        %788 = vmatprep.subr.mxu0 0.0
        %789 = vmatpush1.msra.mxu0 0.0
        %790 = vmatprep.subr.mxu0 0.0
        %791 = vmatpush1.msra.mxu0 0.0
        %792 = vmatprep.subr.mxu0 0.0
        %793 = vmatpush1.msra.mxu0 0.0
        %794 = vmatprep.subr.mxu0 0.0
        %795 = vmatpush1.msra.mxu0 %v721
        %796 = vmatprep.subr.mxu0 0.0
        %797 = vmatpush1.msra.mxu0 %v720
        %798 = vmatprep.subr.mxu0 0.0
        %799 = vmatpush1.msra.mxu0 %v719
        %800 = vmatprep.subr.mxu0 0.0
        %801 = vmatpush1.msra.mxu0 %v718
        %802 = vmatprep.subr.mxu0 0.0
        %803 = vmatpush1.msra.mxu0 %v717
        %804 = vmatprep.subr.mxu0 0.0
        %805 = vmatpush1.msra.mxu0 %v716
        %806 = vmatprep.subr.mxu0 0.0
        %807 = vmatpush1.msra.mxu0 %v715
        %808 = vmatprep.subr.mxu0 0.0
        %809 = vmatpush1.msra.mxu0 %v714
        %810 = vmatprep.subr.mxu0 0.0
        %811 = vmatpush2.msra.mxu0 0.0
        %812 = vmatprep.subr.mxu0 0.0
        %813 = vmatpush2.msra.mxu0 0.0
        %814 = vmatprep.subr.mxu0 0.0
        %815 = vmatpush2.msra.mxu0 0.0
        %816 = vmatprep.subr.mxu0 0.0
        %817 = vmatpush2.msra.mxu0 0.0
        %818 = vmatprep.subr.mxu0 0.0
        %819 = vmatpush2.msra.mxu0 0.0
        %820 = vmatprep.subr.mxu0 0.0
        %821 = vmatpush2.msra.mxu0 0.0
        %822 = vmatprep.subr.mxu0 0.0
        %823 = vmatpush2.msra.mxu0 0.0
        %824 = vmatprep.subr.mxu0 0.0
        %825 = vmatpush2.msra.mxu0 0.0
        %826 = vmatprep.subr.mxu0 0.0
        %827 = vmatpush2.msra.mxu0 0.0
        %828 = vmatprep.subr.mxu0 0.0
        %829 = vmatpush2.msra.mxu0 0.0
        %830 = vmatprep.subr.mxu0 0.0
        %831 = vmatpush2.msra.mxu0 0.0
        %832 = vmatprep.subr.mxu0 0.0
        %833 = vmatpush2.msra.mxu0 0.0
        %834 = vmatprep.subr.mxu0 0.0
        %835 = vmatpush2.msra.mxu0 0.0
        %836 = vmatprep.subr.mxu0 0.0
        %837 = vmatpush2.msra.mxu0 0.0
        %838 = vmatprep.subr.mxu0 0.0
        %839 = vmatpush2.msra.mxu0 0.0
        %840 = vmatprep.subr.mxu0 0.0
        %841 = vmatpush2.msra.mxu0 0.0
        %842 = vmatprep.mubr.f32.mxu0 0.0
        %843 = vmatmul.mubr.f32.gmra.mxu0 %v731
        %v844 = vpop.f32.mrf.mxu0
        %v845 = vadd.f32 %v727, %v844
        %v846 = vpop.f32.mrf.mxu0
        %847 = vmatprep.mubr.f32.mxu0 0.0
        %848 = vmatmul.mubr.f32.gmra.mxu0 %v734
        %v849 = vpop.f32.mrf.mxu0
        %v850 = vadd.f32 %v727, %v849
        %v851 = vpop.f32.mrf.mxu0
        %852 = vmatprep.mubr.f32.mxu0 0.0
        %853 = vmatmul.mubr.f32.gmra.mxu0 %v737
        %v854 = vpop.f32.mrf.mxu0
        %v855 = vadd.f32 %v727, %v854
        %v856 = vpop.f32.mrf.mxu0
        %857 = vmatprep.mubr.f32.mxu0 0.0
        %858 = vmatmul.mubr.f32.gmra.mxu0 %v740
        %v859 = vpop.f32.mrf.mxu0
        %v860 = vadd.f32 %v727, %v859
        %v861 = vpop.f32.mrf.mxu0
        %862 = vmatprep.mubr.f32.mxu0 0.0
        %863 = vmatmul.mubr.f32.gmra.mxu0 %v743
        %v864 = vpop.f32.mrf.mxu0
        %v865 = vadd.f32 %v727, %v864
        %v866 = vpop.f32.mrf.mxu0
        %867 = vmatprep.mubr.f32.mxu0 0.0
        %868 = vmatmul.mubr.f32.gmra.mxu0 %v746
        %v869 = vpop.f32.mrf.mxu0
        %v870 = vadd.f32 %v727, %v869
        %v871 = vpop.f32.mrf.mxu0
        %872 = vmatprep.mubr.f32.mxu0 0.0
        %873 = vmatmul.mubr.f32.gmra.mxu0 %v749
        %v874 = vpop.f32.mrf.mxu0
        %v875 = vadd.f32 %v727, %v874
        %v876 = vpop.f32.mrf.mxu0
        %877 = vmatprep.mubr.f32.mxu0 0.0
        %878 = vmatmul.mubr.f32.gmra.mxu0 %v752
        %v879 = vpop.f32.mrf.mxu0
        %v880 = vadd.f32 %v727, %v879
        %v881 = vpop.f32.mrf.mxu0
        %882 = vmatprep.mubr.f32.mxu0 0.0
        %883 = vmatmul.mubr.f32.gmra.mxu0 %v755
        %v884 = vpop.f32.mrf.mxu0
        %v885 = vadd.f32 %v727, %v884
        %v886 = vpop.f32.mrf.mxu0
        %887 = vmatprep.mubr.f32.mxu0 0.0
        %888 = vmatmul.mubr.f32.gmra.mxu0 %v758
        %v889 = vpop.f32.mrf.mxu0
        %v890 = vadd.f32 %v727, %v889
        %v891 = vpop.f32.mrf.mxu0
        %892 = vmatprep.mubr.f32.mxu0 0.0
        %893 = vmatmul.mubr.f32.gmra.mxu0 %v761
        %v894 = vpop.f32.mrf.mxu0
        %v895 = vadd.f32 %v727, %v894
        %v896 = vpop.f32.mrf.mxu0
        %897 = vmatprep.mubr.f32.mxu0 0.0
        %898 = vmatmul.mubr.f32.gmra.mxu0 %v764
        %v899 = vpop.f32.mrf.mxu0
        %v900 = vadd.f32 %v727, %v899
        %v901 = vpop.f32.mrf.mxu0
        %902 = vmatprep.mubr.f32.mxu0 0.0
        %903 = vmatmul.mubr.f32.gmra.mxu0 %v767
        %v904 = vpop.f32.mrf.mxu0
        %v905 = vadd.f32 %v727, %v904
        %v906 = vpop.f32.mrf.mxu0
        %907 = vmatprep.mubr.f32.mxu0 0.0
        %908 = vmatmul.mubr.f32.gmra.mxu0 %v770
        %v909 = vpop.f32.mrf.mxu0
        %v910 = vadd.f32 %v727, %v909
        %v911 = vpop.f32.mrf.mxu0
        %912 = vmatprep.mubr.f32.mxu0 0.0
        %913 = vmatmul.mubr.f32.gmra.mxu0 %v773
        %v914 = vpop.f32.mrf.mxu0
        %v915 = vadd.f32 %v727, %v914
        %v916 = vpop.f32.mrf.mxu0
        %917 = vmatprep.mubr.f32.mxu0 0.0
        %918 = vmatmul.mubr.f32.gmra.mxu0 %v776
        %v919 = vpop.f32.mrf.mxu0
        %v920 = vadd.f32 %v727, %v919
        %v921 = vpop.f32.mrf.mxu0
        %922 = vdwg.mxu0
        %vm923 = vcmp.gt.f32.partialorder %v358, 1e-06
        %vm924 = vcmp.gt.f32.partialorder %v359, 1e-06
        %vm925 = vcmp.gt.f32.partialorder %v360, 1e-06
        %vm926 = vcmp.gt.f32.partialorder %v361, 1e-06
        %vm927 = vcmp.gt.f32.partialorder %v362, 1e-06
        %vm928 = vcmp.gt.f32.partialorder %v363, 1e-06
        %vm929 = vcmp.gt.f32.partialorder %v364, 1e-06
        %vm930 = vcmp.gt.f32.partialorder %v365, 1e-06
        %vm931 = vcmp.gt.f32.partialorder %v366, 1e-06
        %vm932 = vcmp.gt.f32.partialorder %v367, 1e-06
        %vm933 = vcmp.gt.f32.partialorder %v368, 1e-06
        %vm934 = vcmp.gt.f32.partialorder %v369, 1e-06
        %vm935 = vcmp.gt.f32.partialorder %v370, 1e-06
        %vm936 = vcmp.gt.f32.partialorder %v371, 1e-06
        %vm937 = vcmp.gt.f32.partialorder %v372, 1e-06
        %vm938 = vcmp.gt.f32.partialorder %v373, 1e-06
        %v939 = vsel %vm923, %v358, 1e-06
        %v940 = vsel %vm924, %v359, 1e-06
        %v941 = vsel %vm925, %v360, 1e-06
        %v942 = vsel %vm926, %v361, 1e-06
        %v943 = vsel %vm927, %v362, 1e-06
        %v944 = vsel %vm928, %v363, 1e-06
        %v945 = vsel %vm929, %v364, 1e-06
        %v946 = vsel %vm930, %v365, 1e-06
        %v947 = vsel %vm931, %v366, 1e-06
        %v948 = vsel %vm932, %v367, 1e-06
        %v949 = vsel %vm933, %v368, 1e-06
        %v950 = vsel %vm934, %v369, 1e-06
        %v951 = vsel %vm935, %v370, 1e-06
        %v952 = vsel %vm936, %v371, 1e-06
        %v953 = vsel %vm937, %v372, 1e-06
        %v954 = vsel %vm938, %v373, 1e-06
        %vm955 = vcmp.lt.f32.partialorder %v939, 0.999999
        %vm956 = vcmp.lt.f32.partialorder %v940, 0.999999
        %vm957 = vcmp.lt.f32.partialorder %v941, 0.999999
        %vm958 = vcmp.lt.f32.partialorder %v942, 0.999999
        %vm959 = vcmp.lt.f32.partialorder %v943, 0.999999
        %vm960 = vcmp.lt.f32.partialorder %v944, 0.999999
        %vm961 = vcmp.lt.f32.partialorder %v945, 0.999999
        %vm962 = vcmp.lt.f32.partialorder %v946, 0.999999
        %vm963 = vcmp.lt.f32.partialorder %v947, 0.999999
        %vm964 = vcmp.lt.f32.partialorder %v948, 0.999999
        %vm965 = vcmp.lt.f32.partialorder %v949, 0.999999
        %vm966 = vcmp.lt.f32.partialorder %v950, 0.999999
        %vm967 = vcmp.lt.f32.partialorder %v951, 0.999999
        %vm968 = vcmp.lt.f32.partialorder %v952, 0.999999
        %vm969 = vcmp.lt.f32.partialorder %v953, 0.999999
        %vm970 = vcmp.lt.f32.partialorder %v954, 0.999999
        %v971 = vsel %vm955, %v939, 0.999999
        %v972 = vsel %vm956, %v940, 0.999999
        %v973 = vsel %vm957, %v941, 0.999999
        %v974 = vsel %vm958, %v942, 0.999999
        %v975 = vsel %vm959, %v943, 0.999999
        %v976 = vsel %vm960, %v944, 0.999999
        %v977 = vsel %vm961, %v945, 0.999999
        %v978 = vsel %vm962, %v946, 0.999999
        %v979 = vsel %vm963, %v947, 0.999999
        %v980 = vsel %vm964, %v948, 0.999999
        %v981 = vsel %vm965, %v949, 0.999999
        %v982 = vsel %vm966, %v950, 0.999999
        %v983 = vsel %vm967, %v951, 0.999999
        %v984 = vsel %vm968, %v952, 0.999999
        %v985 = vsel %vm969, %v953, 0.999999
        %v986 = vsel %vm970, %v954, 0.999999
        %v987 = vsub.f32 1.0, %v971
        %v988 = vsub.f32 1.0, %v972
        %v989 = vsub.f32 1.0, %v973
        %v990 = vsub.f32 1.0, %v974
        %v991 = vsub.f32 1.0, %v975
        %v992 = vsub.f32 1.0, %v976
        %v993 = vsub.f32 1.0, %v977
        %v994 = vsub.f32 1.0, %v978
        %v995 = vsub.f32 1.0, %v979
        %v996 = vsub.f32 1.0, %v980
        %v997 = vsub.f32 1.0, %v981
        %v998 = vsub.f32 1.0, %v982
        %v999 = vsub.f32 1.0, %v983
        %v1000 = vsub.f32 1.0, %v984
        %v1001 = vsub.f32 1.0, %v985
        %v1002 = vsub.f32 1.0, %v986
        %v1003 = vmul.f32 %v971, %v987
        %v1004 = vmul.f32 %v972, %v988
        %v1005 = vmul.f32 %v973, %v989
        %v1006 = vmul.f32 %v974, %v990
        %v1007 = vmul.f32 %v975, %v991
        %v1008 = vmul.f32 %v976, %v992
        %v1009 = vmul.f32 %v977, %v993
        %v1010 = vmul.f32 %v978, %v994
        %v1011 = vmul.f32 %v979, %v995
        %v1012 = vmul.f32 %v980, %v996
        %v1013 = vmul.f32 %v981, %v997
        %v1014 = vmul.f32 %v982, %v998
        %v1015 = vmul.f32 %v983, %v999
        %v1016 = vmul.f32 %v984, %v1000
        %v1017 = vmul.f32 %v985, %v1001
        %v1018 = vmul.f32 %v986, %v1002
        %v1019 = vrsqrt.pop %v1003
        %v1020 = vmul.f32 %v1003, %v1019
        %vm1021 = vcmp.eq.f32.partialorder %v1003, inf
        %v1022 = vsel %vm1021, %v1003, %v1020
        %vm1023 = vcmp.eq.f32.partialorder %v1003, 0.0
        %v1024 = vand.u32 %v1003, 2147483648
        %v1025 = vsel %vm1023, %v1024, %v1022
        %v1026 = vrsqrt.pop %v1004
        %v1027 = vmul.f32 %v1004, %v1026
        %vm1028 = vcmp.eq.f32.partialorder %v1004, inf
        %v1029 = vsel %vm1028, %v1004, %v1027
        %vm1030 = vcmp.eq.f32.partialorder %v1004, 0.0
        %v1031 = vand.u32 %v1004, 2147483648
        %v1032 = vsel %vm1030, %v1031, %v1029
        %v1033 = vrsqrt.pop %v1005
        %v1034 = vmul.f32 %v1005, %v1033
        %vm1035 = vcmp.eq.f32.partialorder %v1005, inf
        %v1036 = vsel %vm1035, %v1005, %v1034
        %vm1037 = vcmp.eq.f32.partialorder %v1005, 0.0
        %v1038 = vand.u32 %v1005, 2147483648
        %v1039 = vsel %vm1037, %v1038, %v1036
        %v1040 = vrsqrt.pop %v1006
        %v1041 = vmul.f32 %v1006, %v1040
        %vm1042 = vcmp.eq.f32.partialorder %v1006, inf
        %v1043 = vsel %vm1042, %v1006, %v1041
        %vm1044 = vcmp.eq.f32.partialorder %v1006, 0.0
        %v1045 = vand.u32 %v1006, 2147483648
        %v1046 = vsel %vm1044, %v1045, %v1043
        %v1047 = vrsqrt.pop %v1007
        %v1048 = vmul.f32 %v1007, %v1047
        %vm1049 = vcmp.eq.f32.partialorder %v1007, inf
        %v1050 = vsel %vm1049, %v1007, %v1048
        %vm1051 = vcmp.eq.f32.partialorder %v1007, 0.0
        %v1052 = vand.u32 %v1007, 2147483648
        %v1053 = vsel %vm1051, %v1052, %v1050
        %v1054 = vrsqrt.pop %v1008
        %v1055 = vmul.f32 %v1008, %v1054
        %vm1056 = vcmp.eq.f32.partialorder %v1008, inf
        %v1057 = vsel %vm1056, %v1008, %v1055
        %vm1058 = vcmp.eq.f32.partialorder %v1008, 0.0
        %v1059 = vand.u32 %v1008, 2147483648
        %v1060 = vsel %vm1058, %v1059, %v1057
        %v1061 = vrsqrt.pop %v1009
        %v1062 = vmul.f32 %v1009, %v1061
        %vm1063 = vcmp.eq.f32.partialorder %v1009, inf
        %v1064 = vsel %vm1063, %v1009, %v1062
        %vm1065 = vcmp.eq.f32.partialorder %v1009, 0.0
        %v1066 = vand.u32 %v1009, 2147483648
        %v1067 = vsel %vm1065, %v1066, %v1064
        %v1068 = vrsqrt.pop %v1010
        %v1069 = vmul.f32 %v1010, %v1068
        %vm1070 = vcmp.eq.f32.partialorder %v1010, inf
        %v1071 = vsel %vm1070, %v1010, %v1069
        %vm1072 = vcmp.eq.f32.partialorder %v1010, 0.0
        %v1073 = vand.u32 %v1010, 2147483648
        %v1074 = vsel %vm1072, %v1073, %v1071
        %v1075 = vrsqrt.pop %v1011
        %v1076 = vmul.f32 %v1011, %v1075
        %vm1077 = vcmp.eq.f32.partialorder %v1011, inf
        %v1078 = vsel %vm1077, %v1011, %v1076
        %vm1079 = vcmp.eq.f32.partialorder %v1011, 0.0
        %v1080 = vand.u32 %v1011, 2147483648
        %v1081 = vsel %vm1079, %v1080, %v1078
        %v1082 = vrsqrt.pop %v1012
        %v1083 = vmul.f32 %v1012, %v1082
        %vm1084 = vcmp.eq.f32.partialorder %v1012, inf
        %v1085 = vsel %vm1084, %v1012, %v1083
        %vm1086 = vcmp.eq.f32.partialorder %v1012, 0.0
        %v1087 = vand.u32 %v1012, 2147483648
        %v1088 = vsel %vm1086, %v1087, %v1085
        %v1089 = vrsqrt.pop %v1013
        %v1090 = vmul.f32 %v1013, %v1089
        %vm1091 = vcmp.eq.f32.partialorder %v1013, inf
        %v1092 = vsel %vm1091, %v1013, %v1090
        %vm1093 = vcmp.eq.f32.partialorder %v1013, 0.0
        %v1094 = vand.u32 %v1013, 2147483648
        %v1095 = vsel %vm1093, %v1094, %v1092
        %v1096 = vrsqrt.pop %v1014
        %v1097 = vmul.f32 %v1014, %v1096
        %vm1098 = vcmp.eq.f32.partialorder %v1014, inf
        %v1099 = vsel %vm1098, %v1014, %v1097
        %vm1100 = vcmp.eq.f32.partialorder %v1014, 0.0
        %v1101 = vand.u32 %v1014, 2147483648
        %v1102 = vsel %vm1100, %v1101, %v1099
        %v1103 = vrsqrt.pop %v1015
        %v1104 = vmul.f32 %v1015, %v1103
        %vm1105 = vcmp.eq.f32.partialorder %v1015, inf
        %v1106 = vsel %vm1105, %v1015, %v1104
        %vm1107 = vcmp.eq.f32.partialorder %v1015, 0.0
        %v1108 = vand.u32 %v1015, 2147483648
        %v1109 = vsel %vm1107, %v1108, %v1106
        %v1110 = vrsqrt.pop %v1016
        %v1111 = vmul.f32 %v1016, %v1110
        %vm1112 = vcmp.eq.f32.partialorder %v1016, inf
        %v1113 = vsel %vm1112, %v1016, %v1111
        %vm1114 = vcmp.eq.f32.partialorder %v1016, 0.0
        %v1115 = vand.u32 %v1016, 2147483648
        %v1116 = vsel %vm1114, %v1115, %v1113
        %v1117 = vrsqrt.pop %v1017
        %v1118 = vmul.f32 %v1017, %v1117
        %vm1119 = vcmp.eq.f32.partialorder %v1017, inf
        %v1120 = vsel %vm1119, %v1017, %v1118
        %vm1121 = vcmp.eq.f32.partialorder %v1017, 0.0
        %v1122 = vand.u32 %v1017, 2147483648
        %v1123 = vsel %vm1121, %v1122, %v1120
        %v1124 = vrsqrt.pop %v1018
        %v1125 = vmul.f32 %v1018, %v1124
        %vm1126 = vcmp.eq.f32.partialorder %v1018, inf
        %v1127 = vsel %vm1126, %v1018, %v1125
        %vm1128 = vcmp.eq.f32.partialorder %v1018, 0.0
        %v1129 = vand.u32 %v1018, 2147483648
        %v1130 = vsel %vm1128, %v1129, %v1127
        %v1131 = vadd.f32 %v1025, 0.0001
        %v1132 = vadd.f32 %v1032, 0.0001
        %v1133 = vadd.f32 %v1039, 0.0001
        %v1134 = vadd.f32 %v1046, 0.0001
        %v1135 = vadd.f32 %v1053, 0.0001
        %v1136 = vadd.f32 %v1060, 0.0001
        %v1137 = vadd.f32 %v1067, 0.0001
        %v1138 = vadd.f32 %v1074, 0.0001
        %v1139 = vadd.f32 %v1081, 0.0001
        %v1140 = vadd.f32 %v1088, 0.0001
        %v1141 = vadd.f32 %v1095, 0.0001
        %v1142 = vadd.f32 %v1102, 0.0001
        %v1143 = vadd.f32 %v1109, 0.0001
        %v1144 = vadd.f32 %v1116, 0.0001
        %v1145 = vadd.f32 %v1123, 0.0001
        %v1146 = vadd.f32 %v1130, 0.0001
        %v1147 = vrcp.pop %v1131
        %v1148 = vrcp.pop %v1132
        %v1149 = vrcp.pop %v1133
        %v1150 = vrcp.pop %v1134
        %v1151 = vrcp.pop %v1135
        %v1152 = vrcp.pop %v1136
        %v1153 = vrcp.pop %v1137
        %v1154 = vrcp.pop %v1138
        %v1155 = vrcp.pop %v1139
        %v1156 = vrcp.pop %v1140
        %v1157 = vrcp.pop %v1141
        %v1158 = vrcp.pop %v1142
        %v1159 = vrcp.pop %v1143
        %v1160 = vrcp.pop %v1144
        %v1161 = vrcp.pop %v1145
        %v1162 = vrcp.pop %v1146
        %v1163 = vmul.f32 %v1131, %v1147
        %v1164 = vmul.f32 %v1132, %v1148
        %v1165 = vmul.f32 %v1133, %v1149
        %v1166 = vmul.f32 %v1134, %v1150
        %v1167 = vmul.f32 %v1135, %v1151
        %v1168 = vmul.f32 %v1136, %v1152
        %v1169 = vmul.f32 %v1137, %v1153
        %v1170 = vmul.f32 %v1138, %v1154
        %v1171 = vmul.f32 %v1139, %v1155
        %v1172 = vmul.f32 %v1140, %v1156
        %v1173 = vmul.f32 %v1141, %v1157
        %v1174 = vmul.f32 %v1142, %v1158
        %v1175 = vmul.f32 %v1143, %v1159
        %v1176 = vmul.f32 %v1144, %v1160
        %v1177 = vmul.f32 %v1145, %v1161
        %v1178 = vmul.f32 %v1146, %v1162
        %v1179 = vsub.f32 2.0, %v1163
        %v1180 = vsub.f32 2.0, %v1164
        %v1181 = vsub.f32 2.0, %v1165
        %v1182 = vsub.f32 2.0, %v1166
        %v1183 = vsub.f32 2.0, %v1167
        %v1184 = vsub.f32 2.0, %v1168
        %v1185 = vsub.f32 2.0, %v1169
        %v1186 = vsub.f32 2.0, %v1170
        %v1187 = vsub.f32 2.0, %v1171
        %v1188 = vsub.f32 2.0, %v1172
        %v1189 = vsub.f32 2.0, %v1173
        %v1190 = vsub.f32 2.0, %v1174
        %v1191 = vsub.f32 2.0, %v1175
        %v1192 = vsub.f32 2.0, %v1176
        %v1193 = vsub.f32 2.0, %v1177
        %v1194 = vsub.f32 2.0, %v1178
        %v1195 = vmul.f32 %v1147, %v1179
        %v1196 = vmul.f32 %v1148, %v1180
        %v1197 = vmul.f32 %v1149, %v1181
        %v1198 = vmul.f32 %v1150, %v1182
        %v1199 = vmul.f32 %v1151, %v1183
        %v1200 = vmul.f32 %v1152, %v1184
        %v1201 = vmul.f32 %v1153, %v1185
        %v1202 = vmul.f32 %v1154, %v1186
        %v1203 = vmul.f32 %v1155, %v1187
        %v1204 = vmul.f32 %v1156, %v1188
        %v1205 = vmul.f32 %v1157, %v1189
        %v1206 = vmul.f32 %v1158, %v1190
        %v1207 = vmul.f32 %v1159, %v1191
        %v1208 = vmul.f32 %v1160, %v1192
        %v1209 = vmul.f32 %v1161, %v1193
        %v1210 = vmul.f32 %v1162, %v1194
        %1212 = vset.pattern.permute.xlu0 0
        %1213 = vperm.xlu0 %1212, %v1195
        %v1214 = vpop.permute.xlu0 %1213
        %1217 = vset.pattern.permute.xlu0 0
        %1218 = vperm.xlu0 %1217, %v1196
        %v1219 = vpop.permute.xlu0 %1218
        %1222 = vset.pattern.permute.xlu0 0
        %1223 = vperm.xlu0 %1222, %v1197
        %v1224 = vpop.permute.xlu0 %1223
        %1227 = vset.pattern.permute.xlu0 0
        %1228 = vperm.xlu0 %1227, %v1198
        %v1229 = vpop.permute.xlu0 %1228
        %1232 = vset.pattern.permute.xlu0 0
        %1233 = vperm.xlu0 %1232, %v1199
        %v1234 = vpop.permute.xlu0 %1233
        %1237 = vset.pattern.permute.xlu0 0
        %1238 = vperm.xlu0 %1237, %v1200
        %v1239 = vpop.permute.xlu0 %1238
        %1242 = vset.pattern.permute.xlu0 0
        %1243 = vperm.xlu0 %1242, %v1201
        %v1244 = vpop.permute.xlu0 %1243
        %1247 = vset.pattern.permute.xlu0 0
        %1248 = vperm.xlu0 %1247, %v1202
        %v1249 = vpop.permute.xlu0 %1248
        %1252 = vset.pattern.permute.xlu0 0
        %1253 = vperm.xlu0 %1252, %v1203
        %v1254 = vpop.permute.xlu0 %1253
        %1257 = vset.pattern.permute.xlu0 0
        %1258 = vperm.xlu0 %1257, %v1204
        %v1259 = vpop.permute.xlu0 %1258
        %1262 = vset.pattern.permute.xlu0 0
        %1263 = vperm.xlu0 %1262, %v1205
        %v1264 = vpop.permute.xlu0 %1263
        %1267 = vset.pattern.permute.xlu0 0
        %1268 = vperm.xlu0 %1267, %v1206
        %v1269 = vpop.permute.xlu0 %1268
        %1272 = vset.pattern.permute.xlu0 0
        %1273 = vperm.xlu0 %1272, %v1207
        %v1274 = vpop.permute.xlu0 %1273
        %1277 = vset.pattern.permute.xlu0 0
        %1278 = vperm.xlu0 %1277, %v1208
        %v1279 = vpop.permute.xlu0 %1278
        %1282 = vset.pattern.permute.xlu0 0
        %1283 = vperm.xlu0 %1282, %v1209
        %v1284 = vpop.permute.xlu0 %1283
        %1287 = vset.pattern.permute.xlu0 0
        %1288 = vperm.xlu0 %1287, %v1210
        %v1289 = vpop.permute.xlu0 %1288
        %v1291 = vmul.f32 %v845, %v1214
        %v1292 = vmul.f32 %v850, %v1219
        %v1293 = vmul.f32 %v855, %v1224
        %v1294 = vmul.f32 %v860, %v1229
        %v1295 = vmul.f32 %v865, %v1234
        %v1296 = vmul.f32 %v870, %v1239
        %v1297 = vmul.f32 %v875, %v1244
        %v1298 = vmul.f32 %v880, %v1249
        %v1299 = vmul.f32 %v885, %v1254
        %v1300 = vmul.f32 %v890, %v1259
        %v1301 = vmul.f32 %v895, %v1264
        %v1302 = vmul.f32 %v900, %v1269
        %v1303 = vmul.f32 %v905, %v1274
        %v1304 = vmul.f32 %v910, %v1279
        %v1305 = vmul.f32 %v915, %v1284
        %v1306 = vmul.f32 %v920, %v1289
        %1307 = vst.msk [vmem:[%s308] sm:$0xff] %vm481, %v1291
        %1308 = vst.msk [vmem:[%s308 + $0x8] sm:$0xff] %vm481, %v1292
        %1309 = vst.msk [vmem:[%s308 + $0x10] sm:$0xff] %vm481, %v1293
        %1310 = vst.msk [vmem:[%s308 + $0x18] sm:$0xff] %vm481, %v1294
        %1311 = vst.msk [vmem:[%s308 + $0x20] sm:$0xff] %vm481, %v1295
        %1312 = vst.msk [vmem:[%s308 + $0x28] sm:$0xff] %vm481, %v1296
        %1313 = vst.msk [vmem:[%s308 + $0x30] sm:$0xff] %vm481, %v1297
        %1314 = vst.msk [vmem:[%s308 + $0x38] sm:$0xff] %vm481, %v1298
        %1315 = vst.msk [vmem:[%s308 + $0x40] sm:$0xff] %vm481, %v1299
        %1316 = vst.msk [vmem:[%s308 + $0x48] sm:$0xff] %vm481, %v1300
        %1317 = vst.msk [vmem:[%s308 + $0x50] sm:$0xff] %vm481, %v1301
        %1318 = vst.msk [vmem:[%s308 + $0x58] sm:$0xff] %vm481, %v1302
        %1319 = vst.msk [vmem:[%s308 + $0x60] sm:$0xff] %vm481, %v1303
        %1320 = vst.msk [vmem:[%s308 + $0x68] sm:$0xff] %vm481, %v1304
        %1321 = vst.msk [vmem:[%s308 + $0x70] sm:$0xff] %vm481, %v1305
        %1322 = vst.msk [vmem:[%s308 + $0x78] sm:$0xff] %vm481, %v1306
        %s1323 = sand.u32 %s183, 1
        %s1324 = sand.u32 %s183, 1
        %s1325 = smul.addr %s1324, 128
        %s1326 = scalar_lea.vmem [#allocation2], %s1325
        // Predicated region
        $region49: #{tpu_custom_call.1} parent=47 // pred_check
          %p1327 = pneg %p193
        $region50: #{tpu_custom_call.1} parent=47 // pred_check_branch
          %1329 = sbr.rel (%p1327) target = $region52
        $region51: #{tpu_custom_call.1} parent=47 // pred_region
          %s1330 = smul.u32 16, %s18
          %s1331 = ssub.s32 38, %s1330
          %p1332 = scmp.lt.s32.totalorder %s1331, 16
          %s1333 = scalar_select %p1332, %s1331, 16
          %s1334 = smul.u32 128, %s1333
          %p1335 = scmp.ne.s32.totalorder 0, %s1334
          %s1336 = smul.addr %s1330, 8
          %s1337 = scalar_lea.vmem %s7, %s1336
          // Predicated region
          $region53: #{tpu_custom_call.1} parent=51 // pred_check
            %p1338 = pneg %p1335
          $region54: #{tpu_custom_call.1} parent=51 // pred_check_branch
            %1340 = sbr.rel (%p1338) target = $region56
          $region55: #{tpu_custom_call.1} parent=51 // pred_region
            // Predicated region
            $region57: #{tpu_custom_call.1} parent=55 // pred_check
              _
            $region58: #{tpu_custom_call.1} parent=55 // pred_check_branch
              %1342 = sbr.rel (0) target = $region60
            $region59: #{tpu_custom_call.1} parent=55 // pred_region
              // Predicated region
              $region79: #{tpu_custom_call.1} parent=59 // pred_check
                _
              $region80: #{tpu_custom_call.1} parent=59 // pred_check_branch
                %1422 = sbr.rel (0) target = $region82
              $region81: #{tpu_custom_call.1} parent=59 // pred_region
                %s1423 = sshrl.u32 %s1333, 4
                // While loop
                $region83: #{tpu_custom_call.1} parent=81 // loop_pre_header
                  _
                $region84: #{tpu_custom_call.1} parent=81 // loop_header
                  %s1425 = sphi 0, %s1427
                  %p1426 = scmp.ge.s32.totalorder %s1425, %s1423
                  %s1430 = sphi 0, %s1467
                  %s1431 = sphi %s1326, %s1470
                  %s1432 = sphi %s1337, %s1471
                $region85: #{tpu_custom_call.1} parent=81 // loop_header_branch
                  %1429 = sbr.rel (%p1426) target = $region89
                $region86: #{tpu_custom_call.1} parent=81 // loop_body
                  %v1433 = vld [vmem:[%s1431] sm:$0xff]
                  %1434 = vst [vmem:[%s1432] sm:$0xff] %v1433
                  %v1435 = vld [vmem:[%s1431 + $0x8] sm:$0xff]
                  %1436 = vst [vmem:[%s1432 + $0x8] sm:$0xff] %v1435
                  %v1437 = vld [vmem:[%s1431 + $0x10] sm:$0xff]
                  %1438 = vst [vmem:[%s1432 + $0x10] sm:$0xff] %v1437
                  %v1439 = vld [vmem:[%s1431 + $0x18] sm:$0xff]
                  %1440 = vst [vmem:[%s1432 + $0x18] sm:$0xff] %v1439
                  %v1441 = vld [vmem:[%s1431 + $0x20] sm:$0xff]
                  %1442 = vst [vmem:[%s1432 + $0x20] sm:$0xff] %v1441
                  %v1443 = vld [vmem:[%s1431 + $0x28] sm:$0xff]
                  %1444 = vst [vmem:[%s1432 + $0x28] sm:$0xff] %v1443
                  %v1445 = vld [vmem:[%s1431 + $0x30] sm:$0xff]
                  %1446 = vst [vmem:[%s1432 + $0x30] sm:$0xff] %v1445
                  %v1447 = vld [vmem:[%s1431 + $0x38] sm:$0xff]
                  %1448 = vst [vmem:[%s1432 + $0x38] sm:$0xff] %v1447
                  %v1449 = vld [vmem:[%s1431 + $0x40] sm:$0xff]
                  %1450 = vst [vmem:[%s1432 + $0x40] sm:$0xff] %v1449
                  %v1451 = vld [vmem:[%s1431 + $0x48] sm:$0xff]
                  %1452 = vst [vmem:[%s1432 + $0x48] sm:$0xff] %v1451
                  %v1453 = vld [vmem:[%s1431 + $0x50] sm:$0xff]
                  %1454 = vst [vmem:[%s1432 + $0x50] sm:$0xff] %v1453
                  %v1455 = vld [vmem:[%s1431 + $0x58] sm:$0xff]
                  %1456 = vst [vmem:[%s1432 + $0x58] sm:$0xff] %v1455
                  %v1457 = vld [vmem:[%s1431 + $0x60] sm:$0xff]
                  %1458 = vst [vmem:[%s1432 + $0x60] sm:$0xff] %v1457
                  %v1459 = vld [vmem:[%s1431 + $0x68] sm:$0xff]
                  %1460 = vst [vmem:[%s1432 + $0x68] sm:$0xff] %v1459
                  %v1461 = vld [vmem:[%s1431 + $0x70] sm:$0xff]
                  %1462 = vst [vmem:[%s1432 + $0x70] sm:$0xff] %v1461
                  %v1463 = vld [vmem:[%s1431 + $0x78] sm:$0xff]
                  %1464 = vst [vmem:[%s1432 + $0x78] sm:$0xff] %v1463
                  %s1465 = sadd.s32 1, %s1430
                  %p1466 = scmp.ge.s32.totalorder %s1465, %s1423
                  %s1467 = scalar_select %p1466, 0, %s1465
                  %s1468 = smul.u32 %s1467, 128
                  %s1469 = smul.u32 %s1467, 128
                  %s1470 = scalar_lea.vmem %s1326, %s1468 [#allocation2]
                  %s1471 = scalar_lea.vmem %s1337, %s1469
                $region87: #{tpu_custom_call.1} parent=81 // loop_footer
                  %s1427 = sadd.s32 %s1425, 1
                $region88: #{tpu_custom_call.1} parent=81 // loop_footer_branch
                  %1424 = sbr.rel target = $region84
                $region89: #{tpu_custom_call.1} parent=81 // loop_exit
                  _
                %s1472 = sshrl.u32 %s1333, 4
                %s1473 = sand.u32 %s1333, 15
                %s1474 = smul.u32 %s1472, 16
                %s1475 = smul.u32 8, %s1474
                %s1476 = scalar_lea.vmem %s1326, %s1475 [#allocation2]
                %s1477 = smul.u32 8, %s1474
                %s1478 = scalar_lea.vmem %s1337, %s1477
                // While loop
                $region90: #{tpu_custom_call.1} parent=81 // loop_pre_header
                  _
                $region91: #{tpu_custom_call.1} parent=81 // loop_header
                  %s1480 = sphi 0, %s1482
                  %p1481 = scmp.ge.s32.totalorder %s1480, %s1473
                  %s1485 = sphi 0, %s1492
                  %s1486 = sphi %s1476, %s1495
                  %s1487 = sphi %s1478, %s1496
                $region92: #{tpu_custom_call.1} parent=81 // loop_header_branch
                  %1484 = sbr.rel (%p1481) target = $region96
                $region93: #{tpu_custom_call.1} parent=81 // loop_body
                  %v1488 = vld [vmem:[%s1486] sm:$0xff]
                  %1489 = vst [vmem:[%s1487] sm:$0xff] %v1488
                  %s1490 = sadd.s32 1, %s1485
                  %p1491 = scmp.ge.s32.totalorder %s1490, %s1473
                  %s1492 = scalar_select %p1491, 0, %s1490
                  %s1493 = smul.u32 %s1492, 8
                  %s1494 = smul.u32 %s1492, 8
                  %s1495 = scalar_lea.vmem %s1476, %s1493 [#allocation2]
                  %s1496 = scalar_lea.vmem %s1478, %s1494
                $region94: #{tpu_custom_call.1} parent=81 // loop_footer
                  %s1482 = sadd.s32 %s1480, 1
                $region95: #{tpu_custom_call.1} parent=81 // loop_footer_branch
                  %1479 = sbr.rel target = $region91
                $region96: #{tpu_custom_call.1} parent=81 // loop_exit
                  _
              $region82: #{tpu_custom_call.1} parent=59 // pred_fallthru
                _
              // Predicated region
              $region97: #{tpu_custom_call.1} parent=59 // pred_check
                _
              $region98: #{tpu_custom_call.1} parent=59 // pred_check_branch
                %1498 = sbr.rel target = $region100
              $region99: #{tpu_custom_call.1} parent=59 // pred_region
                _
              $region100: #{tpu_custom_call.1} parent=59 // pred_fallthru
                _
            $region60: #{tpu_custom_call.1} parent=55 // pred_fallthru
              _
            // Predicated region
            $region61: #{tpu_custom_call.1} parent=55 // pred_check
              _
            $region62: #{tpu_custom_call.1} parent=55 // pred_check_branch
              %1344 = sbr.rel target = $region64
            $region63: #{tpu_custom_call.1} parent=55 // pred_region
              %s1346 = ssub.s32 256, 1
              %s1347 = sshrl.u32 %s1333, 4
              // While loop
              $region65: #{tpu_custom_call.1} parent=63 // loop_pre_header
                _
              $region66: #{tpu_custom_call.1} parent=63 // loop_header
                %s1349 = sphi 0, %s1351
                %p1350 = scmp.ge.s32.totalorder %s1349, %s1347
                %s1354 = sphi 0, %s1391
                %s1355 = sphi %s1326, %s1394
                %s1356 = sphi %s1337, %s1395
              $region67: #{tpu_custom_call.1} parent=63 // loop_header_branch
                %1353 = sbr.rel (%p1350) target = $region71
              $region68: #{tpu_custom_call.1} parent=63 // loop_body
                %v1357 = vld [vmem:[%s1355] sm:%s1346]
                %1358 = vst [vmem:[%s1356] sm:%s1346] %v1357
                %v1359 = vld [vmem:[%s1355 + $0x8] sm:%s1346]
                %1360 = vst [vmem:[%s1356 + $0x8] sm:%s1346] %v1359
                %v1361 = vld [vmem:[%s1355 + $0x10] sm:%s1346]
                %1362 = vst [vmem:[%s1356 + $0x10] sm:%s1346] %v1361
                %v1363 = vld [vmem:[%s1355 + $0x18] sm:%s1346]
                %1364 = vst [vmem:[%s1356 + $0x18] sm:%s1346] %v1363
                %v1365 = vld [vmem:[%s1355 + $0x20] sm:%s1346]
                %1366 = vst [vmem:[%s1356 + $0x20] sm:%s1346] %v1365
                %v1367 = vld [vmem:[%s1355 + $0x28] sm:%s1346]
                %1368 = vst [vmem:[%s1356 + $0x28] sm:%s1346] %v1367
                %v1369 = vld [vmem:[%s1355 + $0x30] sm:%s1346]
                %1370 = vst [vmem:[%s1356 + $0x30] sm:%s1346] %v1369
                %v1371 = vld [vmem:[%s1355 + $0x38] sm:%s1346]
                %1372 = vst [vmem:[%s1356 + $0x38] sm:%s1346] %v1371
                %v1373 = vld [vmem:[%s1355 + $0x40] sm:%s1346]
                %1374 = vst [vmem:[%s1356 + $0x40] sm:%s1346] %v1373
                %v1375 = vld [vmem:[%s1355 + $0x48] sm:%s1346]
                %1376 = vst [vmem:[%s1356 + $0x48] sm:%s1346] %v1375
                %v1377 = vld [vmem:[%s1355 + $0x50] sm:%s1346]
                %1378 = vst [vmem:[%s1356 + $0x50] sm:%s1346] %v1377
                %v1379 = vld [vmem:[%s1355 + $0x58] sm:%s1346]
                %1380 = vst [vmem:[%s1356 + $0x58] sm:%s1346] %v1379
                %v1381 = vld [vmem:[%s1355 + $0x60] sm:%s1346]
                %1382 = vst [vmem:[%s1356 + $0x60] sm:%s1346] %v1381
                %v1383 = vld [vmem:[%s1355 + $0x68] sm:%s1346]
                %1384 = vst [vmem:[%s1356 + $0x68] sm:%s1346] %v1383
                %v1385 = vld [vmem:[%s1355 + $0x70] sm:%s1346]
                %1386 = vst [vmem:[%s1356 + $0x70] sm:%s1346] %v1385
                %v1387 = vld [vmem:[%s1355 + $0x78] sm:%s1346]
                %1388 = vst [vmem:[%s1356 + $0x78] sm:%s1346] %v1387
                %s1389 = sadd.s32 1, %s1354
                %p1390 = scmp.ge.s32.totalorder %s1389, %s1347
                %s1391 = scalar_select %p1390, 0, %s1389
                %s1392 = smul.u32 %s1391, 128
                %s1393 = smul.u32 %s1391, 128
                %s1394 = scalar_lea.vmem %s1326, %s1392 [#allocation2]
                %s1395 = scalar_lea.vmem %s1337, %s1393
              $region69: #{tpu_custom_call.1} parent=63 // loop_footer
                %s1351 = sadd.s32 %s1349, 1
              $region70: #{tpu_custom_call.1} parent=63 // loop_footer_branch
                %1348 = sbr.rel target = $region66
              $region71: #{tpu_custom_call.1} parent=63 // loop_exit
                _
              %s1396 = sshrl.u32 %s1333, 4
              %s1397 = sand.u32 %s1333, 15
              %s1398 = smul.u32 %s1396, 16
              %s1399 = smul.u32 8, %s1398
              %s1400 = scalar_lea.vmem %s1326, %s1399 [#allocation2]
              %s1401 = smul.u32 8, %s1398
              %s1402 = scalar_lea.vmem %s1337, %s1401
              // While loop
              $region72: #{tpu_custom_call.1} parent=63 // loop_pre_header
                _
              $region73: #{tpu_custom_call.1} parent=63 // loop_header
                %s1404 = sphi 0, %s1406
                %p1405 = scmp.ge.s32.totalorder %s1404, %s1397
                %s1409 = sphi 0, %s1416
                %s1410 = sphi %s1400, %s1419
                %s1411 = sphi %s1402, %s1420
              $region74: #{tpu_custom_call.1} parent=63 // loop_header_branch
                %1408 = sbr.rel (%p1405) target = $region78
              $region75: #{tpu_custom_call.1} parent=63 // loop_body
                %v1412 = vld [vmem:[%s1410] sm:%s1346]
                %1413 = vst [vmem:[%s1411] sm:%s1346] %v1412
                %s1414 = sadd.s32 1, %s1409
                %p1415 = scmp.ge.s32.totalorder %s1414, %s1397
                %s1416 = scalar_select %p1415, 0, %s1414
                %s1417 = smul.u32 %s1416, 8
                %s1418 = smul.u32 %s1416, 8
                %s1419 = scalar_lea.vmem %s1400, %s1417 [#allocation2]
                %s1420 = scalar_lea.vmem %s1402, %s1418
              $region76: #{tpu_custom_call.1} parent=63 // loop_footer
                %s1406 = sadd.s32 %s1404, 1
              $region77: #{tpu_custom_call.1} parent=63 // loop_footer_branch
                %1403 = sbr.rel target = $region73
              $region78: #{tpu_custom_call.1} parent=63 // loop_exit
                _
            $region64: #{tpu_custom_call.1} parent=55 // pred_fallthru
              _
          $region56: #{tpu_custom_call.1} parent=51 // pred_fallthru
            _
          %1499 = vnop
        $region52: #{tpu_custom_call.1} parent=47 // pred_fallthru
          _
      $region48: #{tpu_custom_call.1} parent=5 // pred_fallthru
        _
      %p1500 = scmp.le.s32.totalorder 2, %s13
      // Predicated region
      $region101: #{tpu_custom_call.1} parent=5 // pred_check
        %p1501 = pneg %p1500
      $region102: #{tpu_custom_call.1} parent=5 // pred_check_branch
        %1503 = sbr.rel (%p1501) target = $region104
      $region103: #{tpu_custom_call.1} parent=5 // pred_region
        %s1504 = ssub.s32 %s13, 2
        // Predicated region
        $region105: #{tpu_custom_call.1} parent=103 // pred_check
          %p1505 = pneg %p199
        $region106: #{tpu_custom_call.1} parent=103 // pred_check_branch
          %1507 = sbr.rel (%p1505) target = $region108
        $region107: #{tpu_custom_call.1} parent=103 // pred_region
          %s1508 = sand.u32 %s184, 1
          %s1509 = sand.u32 %s184, 1
          %s1510 = smul.addr %s1509, 128
          %s1511 = scalar_lea.vmem [#allocation2], %s1510
        $region108: #{tpu_custom_call.1} parent=103 // pred_fallthru
          _
      $region104: #{tpu_custom_call.1} parent=5 // pred_fallthru
        _
    $region6: #{tpu_custom_call.1} parent=1 // loop_footer
      %s17 = sadd.s32 1, %s13
    $region7: #{tpu_custom_call.1} parent=1 // loop_footer_branch
      %12 = sbr.rel target = $region3
    $region8: #{tpu_custom_call.1} parent=1 // loop_exit
      _

</llo_original>
